<compile_context>
chip_gen: v7x
topology: tpu7x:2x2x1
jax: 0.10.0
libtpu: 0.0.40
codegen_flags: <defaults>
</compile_context>

<pallas_src>
import functools

import jax
import jax.numpy as jnp
from jax import lax
from jax.experimental import pallas as pl
from jax.experimental.pallas import tpu as pltpu


def _on_tpu() -> bool:
    try:
        return jax.default_backend() == "tpu"
    except Exception:  # pragma: no cover
        return False


# bf16 MXU operands (f32 accumulation) on real TPUs; plain f32 elsewhere so the
# interpreter / CPU path never sees a BF16xBF16=F32 dot.
_COMPUTE_DTYPE = jnp.bfloat16 if _on_tpu() else jnp.float32


@functools.lru_cache(maxsize=None)
def _vmem_capacity_bytes() -> int:
    if _on_tpu():
        try:
            return int(pltpu.get_tpu_info().vmem_capacity_bytes)
        except Exception:  # pragma: no cover
            pass
    return 128 * 1024 * 1024


def _pick_tq(hw: int, hw4: int, vmem_cap: int) -> int:
    """Largest query tile whose f32 (TQ, HW4) softmax working set fits in ~1/8 VMEM."""
    budget = vmem_cap // 8
    cands = [hw] + [c for c in (4096, 2048, 1024, 512, 256, 128)
                    if c < hw and hw % c == 0]          # descending order
    for c in cands:
        if c * hw4 * 4 <= budget:
            return c
    # No divisor fits the budget: fall back to the smallest candidate rather than
    # silently using HW (correctness concern from review).
    return cands[-1]


def _conv_pool_kernel(xc_ref, wpg_ref, phi_ref, g_ref):
    # xc_ref : (1, C, HW) compute-dtype -- four strided views on the lane axis
    # wpg_ref: (C8 + C2, C)             -- fused [w_phi; w_g]
    # phi_ref: (1, C8, HW4)   g_ref: (1, C2, HW4)
    xc = xc_ref[0]
    hw4 = xc.shape[-1] // 4

    # ONE fused lane-dense matmul for both phi and g (f32 accumulation).
    r = jnp.dot(wpg_ref[...], xc, preferred_element_type=jnp.float32)   # (C8+C2, HW)
    r = r.astype(phi_ref.dtype)                                         # pool in cdt

    # 2x2 maxpool == 4-way max over the lane chunks of the strided views.
    p = jnp.maximum(r[:, 0 * hw4:1 * hw4], r[:, 1 * hw4:2 * hw4])
    p = jnp.maximum(p, r[:, 2 * hw4:3 * hw4])
    p = jnp.maximum(p, r[:, 3 * hw4:4 * hw4])                           # (C8+C2, HW4)

    c8 = phi_ref.shape[1]
    phi_ref[0] = p[:c8]
    g_ref[0] = p[c8:]


def _attention_kernel(x_ref, phi_ref, g_ref, wt_ref, wa_ref, sigma_ref, o_ref):
    # x_ref  : (1, C, TQ) f32        phi_ref: (1, C8, HW4)   g_ref: (1, C2, HW4)
    # wt_ref : (C8, C)               wa_ref : (C, C2)        sigma: (1,) f32 SMEM
    # o_ref  : (1, C, TQ) f32 (lane-dense)
    x = x_ref[0]                                       # (C, TQ) f32
    cdt = phi_ref.dtype

    # theta for this query tile (f32 MXU accumulation).
    theta = jnp.dot(wt_ref[...], x.astype(cdt),
                    preferred_element_type=jnp.float32)                 # (C8, TQ)

    # logits = theta^T @ phi : contract the shared C8 dim directly, no transposes.
    logits = lax.dot_general(theta.astype(cdt), phi_ref[0],
                             (((0,), (0,)), ((), ())),
                             preferred_element_type=jnp.float32)        # (TQ, HW4)

    # Flash-style softmax: never scale the big (TQ, HW4) matrix; matmul the
    # un-normalized exp against g and scale the small (TQ, C2) result instead,
    # using the approx EUP reciprocal.
    m = jnp.max(logits, axis=-1, keepdims=True)
    e = jnp.exp(logits - m)
    denom = jnp.sum(e, axis=-1, keepdims=True)                          # (TQ, 1)

    attn_g = lax.dot_general(e.astype(cdt), g_ref[0],
                             (((1,), (1,)), ((), ())),
                             preferred_element_type=jnp.float32)        # (TQ, C2)
    attn_g = attn_g * pl.reciprocal(denom, approx=True)

    # Final 1x1 conv back to C channels: contract the shared C2 dim of both
    # operands -> lane-dense (C, TQ) output tile, no large transpose.
    y = lax.dot_general(wa_ref[...], attn_g.astype(cdt),
                        (((1,), (1,)), ((), ())),
                        preferred_element_type=jnp.float32)             # (C, TQ)

    # Residual with learned sigma (scalar from SMEM), all f32.
    o_ref[0] = x + sigma_ref[0] * y


@jax.jit
def self_attention(x, w_theta, w_phi, w_g, w_attn, sigma):
    """x: (B, C, H, W) float32 (NCHW).  Returns (B, C, H, W) float32."""
    B, C, H, W = x.shape
    assert C % 8 == 0 and H % 2 == 0 and W % 2 == 0
    HW = H * W
    HW4 = HW // 4
    C8 = C // 8
    C2 = C // 2
    cdt = _COMPUTE_DTYPE

    x_flat = x.reshape(B, C, HW)

    # Four 2x2-strided spatial views concatenated on the lane axis; read once by the
    # per-batch pre-pass (no longer re-read per query tile).
    x_cat = jnp.concatenate(
        [
            x[:, :, 0::2, 0::2].reshape(B, C, HW4),
            x[:, :, 0::2, 1::2].reshape(B, C, HW4),
            x[:, :, 1::2, 0::2].reshape(B, C, HW4),
            x[:, :, 1::2, 1::2].reshape(B, C, HW4),
        ],
        axis=-1,
    ).astype(cdt)                                                       # (B, C, HW)

    wt = w_theta.astype(cdt)                                            # (C8, C)
    wpg = jnp.concatenate([w_phi, w_g], axis=0).astype(cdt)             # (C8+C2, C)
    wa = w_attn.astype(cdt)                                             # (C, C2)
    sigma_arr = jnp.reshape(sigma, (1,)).astype(jnp.float32)

    # Generation-aware VMEM policy (v7x: 64 MiB -> ~48 MiB limit; v5e/v6e: ~96 MiB).
    vmem_cap = _vmem_capacity_bytes()
    vmem_limit = min(vmem_cap * 3 // 4, 96 * 1024 * 1024)

    # --- pre-pass: q-invariant phi / g, computed once per batch -------------------
    phi, g = pl.pallas_call(
        _conv_pool_kernel,
        out_shape=(jax.ShapeDtypeStruct((B, C8, HW4), cdt),
                   jax.ShapeDtypeStruct((B, C2, HW4), cdt)),
        grid_spec=pltpu.PrefetchScalarGridSpec(
            num_scalar_prefetch=0,
            grid=(B,),
            in_specs=[
                pl.BlockSpec((1, C, HW), lambda b: (b, 0, 0)),
                pl.BlockSpec((C8 + C2, C), lambda b: (0, 0)),
            ],
            out_specs=(
                pl.BlockSpec((1, C8, HW4), lambda b: (b, 0, 0)),
                pl.BlockSpec((1, C2, HW4), lambda b: (b, 0, 0)),
            ),
        ),
        compiler_params=pltpu.CompilerParams(
            dimension_semantics=("parallel",),
            vmem_limit_bytes=vmem_limit,
        ),
    )(x_cat, wpg)

    # --- attention kernel: query-tiled, every (b, q) grid point independent -------
    tq = _pick_tq(HW, HW4, vmem_cap)

    out = pl.pallas_call(
        _attention_kernel,
        out_shape=jax.ShapeDtypeStruct((B, C, HW), jnp.float32),
        grid_spec=pltpu.PrefetchScalarGridSpec(
            num_scalar_prefetch=0,
            grid=(B, HW // tq),
            in_specs=[
                pl.BlockSpec((1, C, tq), lambda b, q: (b, 0, q)),
                pl.BlockSpec((1, C8, HW4), lambda b, q: (b, 0, 0)),
                pl.BlockSpec((1, C2, HW4), lambda b, q: (b, 0, 0)),
                # Weights / phi / g only change with b; default double-buffering is
                # acceptable since x_cat no longer lives in this kernel's VMEM.
                pl.BlockSpec((C8, C), lambda b, q: (0, 0)),
                pl.BlockSpec((C, C2), lambda b, q: (0, 0)),
                pl.BlockSpec(memory_space=pltpu.MemorySpace.SMEM),
            ],
            out_specs=pl.BlockSpec((1, C, tq), lambda b, q: (b, 0, q)),
        ),
        compiler_params=pltpu.CompilerParams(
            dimension_semantics=("parallel", "parallel"),
            vmem_limit_bytes=vmem_limit,
        ),
    )(x_flat, phi, g, wt, wa, sigma_arr)

    return out.reshape(B, C, H, W)


def _spectral_normalize(w):
    # spectral_norm(eps=1e-6): divide by the largest singular value (wrapper glue).
    s = jnp.linalg.svd(w, compute_uv=False)[0]
    return w / (s + 1e-6)


def _reference(x, wt, wp, wg, wa, sigma):
    """Pure-JAX f32 reference mirroring the PyTorch forward exactly."""
    B, C, H, W = x.shape
    conv = lambda w, t: jnp.einsum('oc,bchw->bohw', w, t)

    def pool(t):  # 2x2 maxpool, stride 2
        b, c, h, w = t.shape
        return t.reshape(b, c, h // 2, 2, w // 2, 2).max(axis=(3, 5))

    theta = conv(wt, x).reshape(B, C // 8, H * W)
    phi = pool(conv(wp, x)).reshape(B, C // 8, H * W // 4)
    attn = jax.nn.softmax(
        jnp.einsum('bcn,bcm->bnm', theta, phi), axis=-1)       # (B, HW, HW4)
    g = pool(conv(wg, x)).reshape(B, C // 2, H * W // 4)
    attn_g = jnp.einsum('bcm,bnm->bcn', g, attn)               # (B, C/2, HW)
    attn_g = attn_g.reshape(B, C // 2, H, W)
    attn_g = conv(wa, attn_g)
    return x + sigma * attn_g


if __name__ == "__main__":
    B, C, H, W = 2, 32, 16, 16   # in_channels must be divisible by 8
    key = jax.random.PRNGKey(0)
    kx, kt, kp, kg, ka = jax.random.split(key, 5)

    x = jax.random.normal(kx, (B, C, H, W), dtype=jnp.float32)

    # Deterministic synthetic weights (1x1 convs -> plain matrices), with
    # spectral normalization applied as wrapper glue.
    w_theta = _spectral_normalize(
        jax.random.normal(kt, (C // 8, C), dtype=jnp.float32) * 0.1)
    w_phi = _spectral_normalize(
        jax.random.normal(kp, (C // 8, C), dtype=jnp.float32) * 0.1)
    w_g = _spectral_normalize(
        jax.random.normal(kg, (C // 2, C), dtype=jnp.float32) * 0.1)
    w_attn = _spectral_normalize(
        jax.random.normal(ka, (C, C // 2), dtype=jnp.float32) * 0.1)
    # PyTorch initializes sigma to 0 (which would make the output trivially x);
    # use a nonzero value so the attention path is actually exercised.
    sigma = jnp.float32(0.5)

    out = self_attention(x, w_theta, w_phi, w_g, w_attn, sigma)
    out = jax.block_until_ready(out)

    ref = _reference(x, w_theta, w_phi, w_g, w_attn, sigma)
    assert out.shape == (B, C, H, W)
    # bf16 MXU operands + approx reciprocal (on TPU) vs the f32 reference.
    assert jnp.allclose(out, ref, rtol=2e-2, atol=2e-2), "mismatch vs reference"

    print("KERNEL_OK")
</pallas_src>

<mosaic_0001>
module attributes {stable_mosaic.version = 11 : i64} {
  func.func @_conv_pool_kernel(%arg0: i32, %arg1: memref<1x32x256xf32, #tpu.memory_space<vmem>>, %arg2: memref<20x32xf32, #tpu.memory_space<vmem>>, %arg3: memref<1x4x64xf32, #tpu.memory_space<vmem>>, %arg4: memref<1x16x64xf32, #tpu.memory_space<vmem>>) attributes {dimension_semantics = [#tpu.dimension_semantics<parallel>], iteration_bounds = array<i64: 2>, scalar_prefetch = 0 : i64, scratch_operands = 0 : i64, tpu.core_type = #tpu.core_type<tc>, window_params = [{transform_indices = @transform_0, window_bounds = array<i64: 1, 32, 256>}, {pipeline_mode = #tpu.pipeline_mode<synchronous>, transform_indices = @transform_1, window_bounds = array<i64: 20, 32>}, {transform_indices = @transform_2, window_bounds = array<i64: 1, 4, 64>}, {transform_indices = @transform_3, window_bounds = array<i64: 1, 16, 64>}]} {
    %c0 = arith.constant 0 : index
    %c0_0 = arith.constant 0 : index
    %c0_1 = arith.constant 0 : index
    %0 = vector.load %arg1[%c0, %c0_0, %c0_1] : memref<1x32x256xf32, #tpu.memory_space<vmem>>, vector<1x32x256xf32>
    %1 = vector.shape_cast %0 : vector<1x32x256xf32> to vector<32x256xf32>
    %c0_2 = arith.constant 0 : index
    %c0_3 = arith.constant 0 : index
    %2 = vector.load %arg2[%c0_2, %c0_3] : memref<20x32xf32, #tpu.memory_space<vmem>>, vector<20x32xf32>
    %cst = arith.constant dense<0.000000e+00> : vector<20x256xf32>
    %3 = tpu.matmul %2, %1, %cst {dimension_numbers = #tpu.dot_dimension_numbers<[1], [0], [0], [1], [0, 0, 1, 1], [], []>} : vector<20x32xf32>, vector<32x256xf32>, vector<20x256xf32> -> vector<20x256xf32>
    %4 = vector.extract_strided_slice %3 {offsets = [0, 0], sizes = [20, 64], strides = [1, 1]} : vector<20x256xf32> to vector<20x64xf32>
    %5 = vector.extract_strided_slice %3 {offsets = [0, 64], sizes = [20, 64], strides = [1, 1]} : vector<20x256xf32> to vector<20x64xf32>
    %6 = arith.maximumf %4, %5 : vector<20x64xf32>
    %7 = vector.extract_strided_slice %3 {offsets = [0, 128], sizes = [20, 64], strides = [1, 1]} : vector<20x256xf32> to vector<20x64xf32>
    %8 = arith.maximumf %6, %7 : vector<20x64xf32>
    %9 = vector.extract_strided_slice %3 {offsets = [0, 192], sizes = [20, 64], strides = [1, 1]} : vector<20x256xf32> to vector<20x64xf32>
    %10 = arith.maximumf %8, %9 : vector<20x64xf32>
    %11 = vector.extract_strided_slice %10 {offsets = [0, 0], sizes = [4, 64], strides = [1, 1]} : vector<20x64xf32> to vector<4x64xf32>
    %c0_4 = arith.constant 0 : index
    %c0_5 = arith.constant 0 : index
    %c0_6 = arith.constant 0 : index
    %12 = vector.load %arg3[%c0_4, %c0_5, %c0_6] : memref<1x4x64xf32, #tpu.memory_space<vmem>>, vector<1x4x64xf32>
    %13 = vector.shape_cast %12 : vector<1x4x64xf32> to vector<4x64xf32>
    %14 = vector.shape_cast %11 : vector<4x64xf32> to vector<1x4x64xf32>
    tpu.vector_store %arg3[%c0_4, %c0_5, %c0_6], %14 {strides = array<i32>} : memref<1x4x64xf32, #tpu.memory_space<vmem>>, vector<1x4x64xf32>,
    %15 = vector.extract_strided_slice %10 {offsets = [4, 0], sizes = [16, 64], strides = [1, 1]} : vector<20x64xf32> to vector<16x64xf32>
    %c0_7 = arith.constant 0 : index
    %c0_8 = arith.constant 0 : index
    %c0_9 = arith.constant 0 : index
    %16 = vector.load %arg4[%c0_7, %c0_8, %c0_9] : memref<1x16x64xf32, #tpu.memory_space<vmem>>, vector<1x16x64xf32>
    %17 = vector.shape_cast %16 : vector<1x16x64xf32> to vector<16x64xf32>
    %18 = vector.shape_cast %15 : vector<16x64xf32> to vector<1x16x64xf32>
    tpu.vector_store %arg4[%c0_7, %c0_8, %c0_9], %18 {strides = array<i32>} : memref<1x16x64xf32, #tpu.memory_space<vmem>>, vector<1x16x64xf32>,
    return
  }
  func.func @transform_0(%arg0: i32) -> (i32, i32, i32) {
    %c0_i32 = arith.constant 0 : i32
    %c0_i32_0 = arith.constant 0 : i32
    %c0_i32_1 = arith.constant 0 : i32
    return %arg0, %c0_i32, %c0_i32_0 : i32, i32, i32
  }
  func.func @transform_1(%arg0: i32) -> (i32, i32) {
    %c0_i32 = arith.constant 0 : i32
    %c0_i32_0 = arith.constant 0 : i32
    %c0_i32_1 = arith.constant 0 : i32
    return %c0_i32, %c0_i32_0 : i32, i32
  }
  func.func @transform_2(%arg0: i32) -> (i32, i32, i32) {
    %c0_i32 = arith.constant 0 : i32
    %c0_i32_0 = arith.constant 0 : i32
    %c0_i32_1 = arith.constant 0 : i32
    return %arg0, %c0_i32, %c0_i32_0 : i32, i32, i32
  }
  func.func @transform_3(%arg0: i32) -> (i32, i32, i32) {
    %c0_i32 = arith.constant 0 : i32
    %c0_i32_0 = arith.constant 0 : i32
    %c0_i32_1 = arith.constant 0 : i32
    return %arg0, %c0_i32, %c0_i32_0 : i32, i32, i32
  }
}

module attributes {stable_mosaic.version = 11 : i64} {
  func.func @_attention_kernel(%arg0: i32, %arg1: i32, %arg2: memref<1x32x256xf32, #tpu.memory_space<vmem>>, %arg3: memref<1x4x64xf32, #tpu.memory_space<vmem>>, %arg4: memref<1x16x64xf32, #tpu.memory_space<vmem>>, %arg5: memref<4x32xf32, #tpu.memory_space<vmem>>, %arg6: memref<32x16xf32, #tpu.memory_space<vmem>>, %arg7: memref<1xf32, #tpu.memory_space<smem>>, %arg8: memref<1x32x256xf32, #tpu.memory_space<vmem>>) attributes {dimension_semantics = [#tpu.dimension_semantics<parallel>, #tpu.dimension_semantics<parallel>], iteration_bounds = array<i64: 2, 1>, scalar_prefetch = 0 : i64, scratch_operands = 0 : i64, tpu.core_type = #tpu.core_type<tc>, window_params = [{transform_indices = @transform_0, window_bounds = array<i64: 1, 32, 256>}, {transform_indices = @transform_1, window_bounds = array<i64: 1, 4, 64>}, {transform_indices = @transform_2, window_bounds = array<i64: 1, 16, 64>}, {pipeline_mode = #tpu.pipeline_mode<synchronous>, transform_indices = @transform_3, window_bounds = array<i64: 4, 32>}, {pipeline_mode = #tpu.pipeline_mode<synchronous>, transform_indices = @transform_4, window_bounds = array<i64: 32, 16>}, {transform_indices = @transform_5, window_bounds = array<i64: 1>}, {transform_indices = @transform_6, window_bounds = array<i64: 1, 32, 256>}]} {
    %c0 = arith.constant 0 : index
    %c0_0 = arith.constant 0 : index
    %c0_1 = arith.constant 0 : index
    %0 = vector.load %arg2[%c0, %c0_0, %c0_1] : memref<1x32x256xf32, #tpu.memory_space<vmem>>, vector<1x32x256xf32>
    %1 = vector.shape_cast %0 : vector<1x32x256xf32> to vector<32x256xf32>
    %c0_2 = arith.constant 0 : index
    %c0_3 = arith.constant 0 : index
    %2 = vector.load %arg5[%c0_2, %c0_3] : memref<4x32xf32, #tpu.memory_space<vmem>>, vector<4x32xf32>
    %cst = arith.constant dense<0.000000e+00> : vector<4x256xf32>
    %3 = tpu.matmul %2, %1, %cst {dimension_numbers = #tpu.dot_dimension_numbers<[1], [0], [0], [1], [0, 0, 1, 1], [], []>} : vector<4x32xf32>, vector<32x256xf32>, vector<4x256xf32> -> vector<4x256xf32>
    %c0_4 = arith.constant 0 : index
    %c0_5 = arith.constant 0 : index
    %c0_6 = arith.constant 0 : index
    %4 = vector.load %arg3[%c0_4, %c0_5, %c0_6] : memref<1x4x64xf32, #tpu.memory_space<vmem>>, vector<1x4x64xf32>
    %5 = vector.shape_cast %4 : vector<1x4x64xf32> to vector<4x64xf32>
    %cst_7 = arith.constant dense<0.000000e+00> : vector<256x64xf32>
    %6 = tpu.matmul %3, %5, %cst_7 {dimension_numbers = #tpu.dot_dimension_numbers<[0], [0], [1], [1], [0, 1, 1, 1], [], []>} : vector<4x256xf32>, vector<4x64xf32>, vector<256x64xf32> -> vector<256x64xf32>
    %cst_8 = arith.constant dense<0xFF800000> : vector<256xf32>
    %7 = vector.multi_reduction <maximumf>, %6, %cst_8 [1] : vector<256x64xf32> to vector<256xf32>
    %8 = vector.shape_cast %7 : vector<256xf32> to vector<256x1xf32>
    %9 = vector.broadcast %8 : vector<256x1xf32> to vector<256x64xf32>
    %10 = arith.subf %6, %9 : vector<256x64xf32>
    %11 = math.exp %10 : vector<256x64xf32>
    %cst_9 = arith.constant dense<0.000000e+00> : vector<256xf32>
    %12 = vector.multi_reduction <add>, %11, %cst_9 [1] : vector<256x64xf32> to vector<256xf32>
    %13 = vector.shape_cast %12 : vector<256xf32> to vector<256x1xf32>
    %c0_10 = arith.constant 0 : index
    %c0_11 = arith.constant 0 : index
    %c0_12 = arith.constant 0 : index
    %14 = vector.load %arg4[%c0_10, %c0_11, %c0_12] : memref<1x16x64xf32, #tpu.memory_space<vmem>>, vector<1x16x64xf32>
    %15 = vector.shape_cast %14 : vector<1x16x64xf32> to vector<16x64xf32>
    %cst_13 = arith.constant dense<0.000000e+00> : vector<256x16xf32>
    %16 = tpu.matmul %11, %15, %cst_13 {dimension_numbers = #tpu.dot_dimension_numbers<[1], [1], [0], [0], [0, 0, 1, 0], [], []>} : vector<256x64xf32>, vector<16x64xf32>, vector<256x16xf32> -> vector<256x16xf32>
    %17 = tpu.reciprocal %13 {approx = true} : vector<256x1xf32> -> vector<256x1xf32>
    %18 = vector.broadcast %17 : vector<256x1xf32> to vector<256x16xf32>
    %19 = arith.mulf %16, %18 : vector<256x16xf32>
    %c0_14 = arith.constant 0 : index
    %c0_15 = arith.constant 0 : index
    %20 = vector.load %arg6[%c0_14, %c0_15] : memref<32x16xf32, #tpu.memory_space<vmem>>, vector<32x16xf32>
    %cst_16 = arith.constant dense<0.000000e+00> : vector<32x256xf32>
    %21 = tpu.matmul %20, %19, %cst_16 {dimension_numbers = #tpu.dot_dimension_numbers<[1], [1], [0], [0], [0, 0, 1, 0], [], []>} : vector<32x16xf32>, vector<256x16xf32>, vector<32x256xf32> -> vector<32x256xf32>
    %c0_17 = arith.constant 0 : index
    %22 = memref.load %arg7[%c0_17] : memref<1xf32, #tpu.memory_space<smem>>
    %23 = vector.broadcast %22 : f32 to vector<32x256xf32>
    %24 = arith.mulf %23, %21 : vector<32x256xf32>
    %25 = arith.addf %1, %24 : vector<32x256xf32>
    %c0_18 = arith.constant 0 : index
    %c0_19 = arith.constant 0 : index
    %c0_20 = arith.constant 0 : index
    %26 = vector.load %arg8[%c0_18, %c0_19, %c0_20] : memref<1x32x256xf32, #tpu.memory_space<vmem>>, vector<1x32x256xf32>
    %27 = vector.shape_cast %26 : vector<1x32x256xf32> to vector<32x256xf32>
    %28 = vector.shape_cast %25 : vector<32x256xf32> to vector<1x32x256xf32>
    tpu.vector_store %arg8[%c0_18, %c0_19, %c0_20], %28 {strides = array<i32>} : memref<1x32x256xf32, #tpu.memory_space<vmem>>, vector<1x32x256xf32>,
    return
  }
  func.func @transform_0(%arg0: i32, %arg1: i32) -> (i32, i32, i32) {
    %c0_i32 = arith.constant 0 : i32
    %c0_i32_0 = arith.constant 0 : i32
    return %arg0, %c0_i32, %arg1 : i32, i32, i32
  }
  func.func @transform_1(%arg0: i32, %arg1: i32) -> (i32, i32, i32) {
    %c0_i32 = arith.constant 0 : i32
    %c0_i32_0 = arith.constant 0 : i32
    %c0_i32_1 = arith.constant 0 : i32
    return %arg0, %c0_i32, %c0_i32_0 : i32, i32, i32
  }
  func.func @transform_2(%arg0: i32, %arg1: i32) -> (i32, i32, i32) {
    %c0_i32 = arith.constant 0 : i32
    %c0_i32_0 = arith.constant 0 : i32
    %c0_i32_1 = arith.constant 0 : i32
    return %arg0, %c0_i32, %c0_i32_0 : i32, i32, i32
  }
  func.func @transform_3(%arg0: i32, %arg1: i32) -> (i32, i32) {
    %c0_i32 = arith.constant 0 : i32
    %c0_i32_0 = arith.constant 0 : i32
    %c0_i32_1 = arith.constant 0 : i32
    return %c0_i32, %c0_i32_0 : i32, i32
  }
  func.func @transform_4(%arg0: i32, %arg1: i32) -> (i32, i32) {
    %c0_i32 = arith.constant 0 : i32
    %c0_i32_0 = arith.constant 0 : i32
    %c0_i32_1 = arith.constant 0 : i32
    return %c0_i32, %c0_i32_0 : i32, i32
  }
  func.func @transform_5(%arg0: i32, %arg1: i32) -> i32 {
    %c0_i32 = arith.constant 0 : i32
    %c0_i32_0 = arith.constant 0 : i32
    return %c0_i32 : i32
  }
  func.func @transform_6(%arg0: i32, %arg1: i32) -> (i32, i32, i32) {
    %c0_i32 = arith.constant 0 : i32
    %c0_i32_0 = arith.constant 0 : i32
    return %arg0, %c0_i32, %arg1 : i32, i32, i32
  }
}

</mosaic_0001>

<llo_original>
// kernel: self_attention.2
$region0: #{self_attention.2}
  #allocation0 [shape = 'u32[]', space=smem, size = 0x4, offset = 0x4, fixed_abs, tag = 'smem constant byte address 0x4 - core index']
  #allocation1 [shape = 'u32[144,128]{1,0:T(1,128)}', space=vmem, size = 0x12000, scoped, tag = 'internal scratch']
  %s0 = inlined_call_operand.hbm [shape: f32[2,32,256], index: 0, kind: input, shape index: {}]
  %s1 = inlined_call_operand.hbm [shape: f32[20,32], index: 1, kind: input, shape index: {}]
  %s2 = inlined_call_operand.hbm [shape: f32[2,4,64], index: 2, kind: output, shape index: {0}]
  %s3 = inlined_call_operand.hbm [shape: f32[2,16,64], index: 3, kind: output, shape index: {1}]
  %4 = xla_tuple %s2, %s3
  %s5 = sld [smem:[#allocation0]]
  $region57: #{self_attention.2} parent=0
    _
  %s7 = ssub.s32 1, %s5
  %s8 = scalar_select 0, %s7, %s5
  $region1: #{self_attention.2} parent=0
    #allocation2 [shape = 'u8[65536]{0}', space=vmem, size = 0x10000, scoped, tag = 'input window, operand 0']
    #allocation3 [shape = 's32[2]{0}', space=sflag, size = 0x8, scoped, tag = 'scoped memory for self_attention.2']
    #allocation4 [shape = 's32[2]{0}', space=sflag, size = 0x8, scoped, tag = 'scoped memory for self_attention.2']
    #allocation5 [shape = 'u8[12288]{0}', space=vmem, size = 0x3000, scoped, tag = 'input window, operand 1, single buffered']
    #allocation6 [shape = 's32[1]{0}', space=sflag, size = 0x4, scoped, tag = 'scoped memory for self_attention.2']
    #allocation7 [shape = 'u8[4096]{0}', space=vmem, size = 0x1000, scoped, tag = 'output window, operand 0']
    #allocation8 [shape = 'u8[16384]{0}', space=vmem, size = 0x4000, scoped, tag = 'output window, operand 1']
    #allocation9 [shape = 's32[2]{0}', space=sflag, size = 0x8, scoped, tag = 'scoped memory for self_attention.2']
    %9 = vsyncpa [#allocation3], 0
    %s10 = scalar_lea.sflag [#allocation3], 1
    %11 = vsyncpa %s10, 0
    %12 = vsyncpa [#allocation6], 0
    %13 = vsyncpa [#allocation4], 0
    %s14 = scalar_lea.sflag [#allocation4], 1
    %15 = vsyncpa %s14, 0
    %16 = vsyncpa [#allocation9], 0
    %s17 = scalar_lea.sflag [#allocation9], 1
    %18 = vsyncpa %s17, 0
    loop: start=0, step=1, limit=4
    $region2: #{self_attention.2} parent=1 // loop_pre_header
      _
    $region3: #{self_attention.2} parent=1 // loop_header
      %s20 = sphi 0, %s24
      %p21 = scmp.ge.s32.totalorder %s20, 4
      %s30 = sphi 0, %s32
      %s33 = sphi 0, %s30
      %s34 = sphi 0, %s33
      %s50 = sphi 0, %s34
      %s54 = sphi 0, %s54
      %s56 = sphi 0, %s54
      %s57 = sphi 0, %s56
      %s71 = sphi 0, %s57
      %s77 = sphi 0, %s79
      %s80 = sphi 0, %s77
      %s81 = sphi 0, %s80
      %s97 = sphi 0, %s81
      %s103 = sphi 0, %s105
      %s106 = sphi 0, %s103
      %s107 = sphi 0, %s106
      %s123 = sphi 0, %s107
    $region4: #{self_attention.2} parent=1 // loop_header_branch
      %23 = sbr.rel (%p21) target = $region8
    $region5: #{self_attention.2} parent=1 // loop_body
      %s25 = ssub.s32 %s20, 1
      %s26 = ssub.s32 %s20, 2
      %s27 = sadd.s32 %s20, 1
      %s28 = ssub.s32 %s20, %s27
      %p29 = scmp.eq.s32.totalorder %s28, 0
      %s31 = sadd.s32 %s30, 1
      %s32 = scalar_select %p29, %s30, %s31
      %p35 = pneg %p29
      %p36 = scmp.eq.s32.totalorder %s20, 1
      %p37 = por %p35, %p36
      %p38 = scmp.ne.s32.totalorder %s30, %s33
      %p39 = scmp.eq.s32.totalorder %s20, 0
      %p40 = por %p38, %p39
      %p41 = scmp.ne.s32.totalorder %s30, %s33
      %p42 = scmp.eq.s32.totalorder %s25, 1
      %p43 = por %p41, %p42
      %p44 = scmp.ne.s32.totalorder %s33, %s34
      %p45 = scmp.eq.s32.totalorder %s25, 0
      %p46 = por %p44, %p45
      %p47 = scmp.ne.s32.totalorder %s33, %s34
      %p48 = scmp.eq.s32.totalorder %s26, 1
      %p49 = por %p47, %p48
      %p51 = scmp.ne.s32.totalorder %s34, %s50
      %p52 = scmp.eq.s32.totalorder %s26, 0
      %p53 = por %p51, %p52
      %s55 = sadd.s32 %s54, 1
      %p58 = scmp.eq.s32.totalorder %s20, 1
      %p59 = scmp.ne.s32.totalorder %s54, %s56
      %p60 = scmp.eq.s32.totalorder %s20, 0
      %p61 = por %p59, %p60
      %p62 = scmp.ne.s32.totalorder %s54, %s56
      %p63 = scmp.eq.s32.totalorder %s25, 1
      %p64 = por %p62, %p63
      %p65 = scmp.ne.s32.totalorder %s56, %s57
      %p66 = scmp.eq.s32.totalorder %s25, 0
      %p67 = por %p65, %p66
      %p68 = scmp.ne.s32.totalorder %s56, %s57
      %p69 = scmp.eq.s32.totalorder %s26, 1
      %p70 = por %p68, %p69
      %p72 = scmp.ne.s32.totalorder %s57, %s71
      %p73 = scmp.eq.s32.totalorder %s26, 0
      %p74 = por %p72, %p73
      %s75 = ssub.s32 %s20, %s27
      %p76 = scmp.eq.s32.totalorder %s75, 0
      %s78 = sadd.s32 %s77, 1
      %s79 = scalar_select %p76, %s77, %s78
      %p82 = pneg %p76
      %p83 = scmp.eq.s32.totalorder %s20, 1
      %p84 = por %p82, %p83
      %p85 = scmp.ne.s32.totalorder %s77, %s80
      %p86 = scmp.eq.s32.totalorder %s20, 0
      %p87 = por %p85, %p86
      %p88 = scmp.ne.s32.totalorder %s77, %s80
      %p89 = scmp.eq.s32.totalorder %s25, 1
      %p90 = por %p88, %p89
      %p91 = scmp.ne.s32.totalorder %s80, %s81
      %p92 = scmp.eq.s32.totalorder %s25, 0
      %p93 = por %p91, %p92
      %p94 = scmp.ne.s32.totalorder %s80, %s81
      %p95 = scmp.eq.s32.totalorder %s26, 1
      %p96 = por %p94, %p95
      %p98 = scmp.ne.s32.totalorder %s81, %s97
      %p99 = scmp.eq.s32.totalorder %s26, 0
      %p100 = por %p98, %p99
      %s101 = ssub.s32 %s20, %s27
      %p102 = scmp.eq.s32.totalorder %s101, 0
      %s104 = sadd.s32 %s103, 1
      %s105 = scalar_select %p102, %s103, %s104
      %p108 = pneg %p102
      %p109 = scmp.eq.s32.totalorder %s20, 1
      %p110 = por %p108, %p109
      %p111 = scmp.ne.s32.totalorder %s103, %s106
      %p112 = scmp.eq.s32.totalorder %s20, 0
      %p113 = por %p111, %p112
      %p114 = scmp.ne.s32.totalorder %s103, %s106
      %p115 = scmp.eq.s32.totalorder %s25, 1
      %p116 = por %p114, %p115
      %p117 = scmp.ne.s32.totalorder %s106, %s107
      %p118 = scmp.eq.s32.totalorder %s25, 0
      %p119 = por %p117, %p118
      %p120 = scmp.ne.s32.totalorder %s106, %s107
      %p121 = scmp.eq.s32.totalorder %s26, 1
      %p122 = por %p120, %p121
      %p124 = scmp.ne.s32.totalorder %s107, %s123
      %p125 = scmp.eq.s32.totalorder %s26, 0
      %p126 = por %p124, %p125
      %p127 = scmp.le.s32.totalorder 1, %s20
      %p128 = scmp.lt.s32.totalorder %s20, 3
      %p129 = pnand %p127, %p128
      %p130 = pneg %p129
      // Predicated region
      $region9: #{self_attention.2} parent=5 // pred_check
        _
      $region10: #{self_attention.2} parent=5 // pred_check_branch
        %132 = sbr.rel (%p129) target = $region12
      $region11: #{self_attention.2} parent=5 // pred_region
        %s133 = ssub.s32 %s20, 1
        // Predicated region
        $region13: #{self_attention.2} parent=11 // pred_check
          %p134 = pneg %p67
        $region14: #{self_attention.2} parent=11 // pred_check_branch
          %136 = sbr.rel (%p134) target = $region16
        $region15: #{self_attention.2} parent=11 // pred_region
          %s138 = ssub.s32 384, 384
          %139 = vsyncadd [#allocation6], %s138
          %s140 = sshll.u32 [#allocation5], 4
          %s141 = int_to_ptr.vmem [resolvable:$true] %s140
          %146 = dma.hbm_to_vmem [thread:$0]  %s1, 384, %s141, [#allocation6], 128, 128, 8
        $region16: #{self_attention.2} parent=11 // pred_fallthru
          _
      $region12: #{self_attention.2} parent=5 // pred_fallthru
        _
      %p147 = scmp.lt.s32.totalorder %s20, 2
      // Predicated region
      $region17: #{self_attention.2} parent=5 // pred_check
        %p148 = pneg %p147
      $region18: #{self_attention.2} parent=5 // pred_check_branch
        %150 = sbr.rel (%p148) target = $region20
      $region19: #{self_attention.2} parent=5 // pred_region
        // Predicated region
        $region21: #{self_attention.2} parent=19 // pred_check
          %p151 = pneg %p40
        $region22: #{self_attention.2} parent=19 // pred_check_branch
          %153 = sbr.rel (%p151) target = $region24
        $region23: #{self_attention.2} parent=19 // pred_region
          %s154 = sand.u32 %s30, 1
          %s155 = scalar_lea.sflag [#allocation3], %s154
          %s156 = sand.u32 %s30, 1
          %s157 = smul.addr %s156, 64
          %s158 = scalar_lea.vmem [#allocation2], %s157
          %s160 = ssub.s32 1024, 1024
          %161 = vsyncadd %s155, %s160
          %s162 = smul.addr %s20, 8
          %s163 = smul.addr %s162, 128
          %s164 = scalar_lea.hbm %s0, %s163
          %s165 = sshll.u32 %s158, 4
          %s166 = int_to_ptr.vmem [resolvable:$true] %s165
          %171 = dma.hbm_to_vmem [thread:$0]  %s164, 1024, %s166, %s155, 256, 256, 16
        $region24: #{self_attention.2} parent=19 // pred_fallthru
          _
      $region20: #{self_attention.2} parent=5 // pred_fallthru
        _
      %p172 = scmp.le.s32.totalorder 1, %s20
      %p173 = scmp.lt.s32.totalorder %s20, 3
      %p174 = pnand %p172, %p173
      %p175 = pneg %p174
      // Predicated region
      $region25: #{self_attention.2} parent=5 // pred_check
        _
      $region26: #{self_attention.2} parent=5 // pred_check_branch
        %177 = sbr.rel (%p174) target = $region28
      $region27: #{self_attention.2} parent=5 // pred_region
        %s178 = ssub.s32 %s20, 1
        %s179 = sand.u32 %s33, 1
        %s180 = scalar_lea.sflag [#allocation3], %s179
        %s181 = sand.u32 %s33, 1
        %s182 = smul.addr %s181, 64
        %s183 = scalar_lea.vmem [#allocation2], %s182
        // Predicated region
        $region29: #{self_attention.2} parent=27 // pred_check
          %p184 = pneg %p46
        $region30: #{self_attention.2} parent=27 // pred_check_branch
          %186 = sbr.rel (%p184) target = $region32
        $region31: #{self_attention.2} parent=27 // pred_region
          %187 = dma.done %s180, 1024
        $region32: #{self_attention.2} parent=27 // pred_fallthru
          _
        // Predicated region
        $region33: #{self_attention.2} parent=27 // pred_check
          %p188 = pneg %p67
        $region34: #{self_attention.2} parent=27 // pred_check_branch
          %190 = sbr.rel (%p188) target = $region36
        $region35: #{self_attention.2} parent=27 // pred_region
          %191 = dma.done [#allocation6], 384
        $region36: #{self_attention.2} parent=27 // pred_fallthru
          _
        %s192 = sand.u32 %s33, 1
        %s193 = scalar_lea.sflag [#allocation3], %s192
        %s194 = sand.u32 %s33, 1
        %s195 = smul.addr %s194, 64
        %s196 = scalar_lea.vmem [#allocation2], %s195
        %p197 = pneg %p46
        %p198 = pneg %p43
        %p199 = pneg %p67
        %p200 = pneg %p64
        %p201 = pneg %p93
        %p202 = pneg %p90
        %s203 = sand.u32 %s80, 1
        %s204 = scalar_lea.sflag [#allocation4], %s203
        %s205 = sand.u32 %s80, 1
        %s206 = smul.addr %s205, 4
        %s207 = scalar_lea.vmem [#allocation7], %s206
        %p208 = pneg %p119
        %p209 = pneg %p116
        %s210 = sand.u32 %s106, 1
        %s211 = scalar_lea.sflag [#allocation9], %s210
        %s212 = sand.u32 %s106, 1
        %s213 = smul.addr %s212, 16
        %s214 = scalar_lea.vmem [#allocation8], %s213
        %v215 = vld [vmem:[%s183] sm:$0xff]
        %v216 = vld [vmem:[%s183 + $0x8] sm:$0xff]
        %v217 = vld [vmem:[%s183 + $0x10] sm:$0xff]
        %v218 = vld [vmem:[%s183 + $0x18] sm:$0xff]
        %v219 = vld [vmem:[%s183 + $0x20] sm:$0xff]
        %v220 = vld [vmem:[%s183 + $0x28] sm:$0xff]
        %v221 = vld [vmem:[%s183 + $0x30] sm:$0xff]
        %v222 = vld [vmem:[%s183 + $0x38] sm:$0xff]
        %v223 = vld [vmem:[#allocation5] sm:$0xff]
        %v224 = vld [vmem:[#allocation5 + $0x8] sm:$0xff]
        %v225 = vld [vmem:[#allocation5 + $0x10] sm:$0xf]
        %vm226 = vcmask 261120
        %v228 = vsel %vm226, %v223, 0
        %v231 = vsel %vm226, %v224, 0
        %v234 = vsel %vm226, %v225, 0
        %236 = vmatprep.subr.mxu0 %v216
        %237 = vmatpush1.msra.mxu0 %v215
        %238 = vmatprep.subr.mxu0 %v218
        %239 = vmatpush1.msra.mxu0 %v217
        %240 = vmatprep.subr.mxu0 %v220
        %241 = vmatpush1.msra.mxu0 %v219
        %242 = vmatprep.subr.mxu0 %v222
        %243 = vmatpush1.msra.mxu0 %v221
        %244 = vmatprep.subr.mxu0 0.0
        %245 = vmatpush1.msra.mxu0 0.0
        %246 = vmatprep.subr.mxu0 0.0
        %247 = vmatpush1.msra.mxu0 0.0
        %248 = vmatprep.subr.mxu0 0.0
        %249 = vmatpush1.msra.mxu0 0.0
        %250 = vmatprep.subr.mxu0 0.0
        %251 = vmatpush1.msra.mxu0 0.0
        %252 = vmatprep.subr.mxu0 0.0
        %253 = vmatpush1.msra.mxu0 0.0
        %254 = vmatprep.subr.mxu0 0.0
        %255 = vmatpush1.msra.mxu0 0.0
        %256 = vmatprep.subr.mxu0 0.0
        %257 = vmatpush1.msra.mxu0 0.0
        %258 = vmatprep.subr.mxu0 0.0
        %259 = vmatpush1.msra.mxu0 0.0
        %260 = vmatprep.subr.mxu0 0.0
        %261 = vmatpush1.msra.mxu0 0.0
        %262 = vmatprep.subr.mxu0 0.0
        %263 = vmatpush1.msra.mxu0 0.0
        %264 = vmatprep.subr.mxu0 0.0
        %265 = vmatpush1.msra.mxu0 0.0
        %266 = vmatprep.subr.mxu0 0.0
        %267 = vmatpush1.msra.mxu0 0.0
        %268 = vmatprep.subr.mxu0 0.0
        %269 = vmatpush1.msra.mxu0 0.0
        %270 = vmatprep.subr.mxu0 0.0
        %271 = vmatpush1.msra.mxu0 0.0
        %272 = vmatprep.subr.mxu0 0.0
        %273 = vmatpush1.msra.mxu0 0.0
        %274 = vmatprep.subr.mxu0 0.0
        %275 = vmatpush1.msra.mxu0 0.0
        %276 = vmatprep.subr.mxu0 0.0
        %277 = vmatpush1.msra.mxu0 0.0
        %278 = vmatprep.subr.mxu0 0.0
        %279 = vmatpush1.msra.mxu0 0.0
        %280 = vmatprep.subr.mxu0 0.0
        %281 = vmatpush1.msra.mxu0 0.0
        %282 = vmatprep.subr.mxu0 0.0
        %283 = vmatpush1.msra.mxu0 0.0
        %284 = vmatprep.subr.mxu0 0.0
        %285 = vmatpush1.msra.mxu0 0.0
        %286 = vmatprep.subr.mxu0 0.0
        %287 = vmatpush1.msra.mxu0 0.0
        %288 = vmatprep.subr.mxu0 0.0
        %289 = vmatpush1.msra.mxu0 0.0
        %290 = vmatprep.subr.mxu0 0.0
        %291 = vmatpush1.msra.mxu0 0.0
        %292 = vmatprep.subr.mxu0 0.0
        %293 = vmatpush1.msra.mxu0 0.0
        %294 = vmatprep.subr.mxu0 0.0
        %295 = vmatpush1.msra.mxu0 0.0
        %296 = vmatprep.subr.mxu0 0.0
        %297 = vmatpush1.msra.mxu0 0.0
        %298 = vmatprep.subr.mxu0 0.0
        %299 = vmatpush1.msra.mxu0 0.0
        %300 = vmatprep.mubr.f32.mxu0 0.0
        %301 = vmatmul.mubr.f32.gmra.mrb[0].mxu0 %v228
        %v302 = vpop.f32.mrb[0].mxu0
        %v303 = vadd.f32 0.0, %v302
        %v304 = vpop.f32.mrb[0].mxu0
        %v305 = vadd.f32 0.0, %v304
        %306 = vmatprep.mubr.f32.mxu0 0.0
        %307 = vmatmul.mubr.f32.gmra.mrb[0].mxu0 %v231
        %v308 = vpop.f32.mrb[0].mxu0
        %v309 = vadd.f32 0.0, %v308
        %v310 = vpop.f32.mrb[0].mxu0
        %v311 = vadd.f32 0.0, %v310
        %312 = vmatprep.mubr.f32.mxu0 0.0
        %313 = vmatmul.mubr.f32.gmra.mrb[0].mxu0 %v234
        %v314 = vpop.f32.mrb[0].mxu0
        %v315 = vadd.f32 0.0, %v314
        %v316 = vpop.f32.mrb[0].mxu0
        %v317 = vadd.f32 0.0, %v316
        %318 = vdwg.mxu0
        %322 = vrot.lane.b32.xlu0 %v303, 64
        %v323 = vpop.permute.xlu0 %322
        %324 = vrot.lane.b32.xlu0 %v309, 64
        %v325 = vpop.permute.xlu0 %324
        %326 = vrot.lane.b32.xlu0 %v315, 64
        %v327 = vpop.permute.xlu0 %326
        %v331 = vmax.f32 %v303, %v323
        %v332 = vmax.f32 %v309, %v325
        %v333 = vmax.f32 %v315, %v327
        %v334 = vmax.f32 %v331, %v305
        %v335 = vmax.f32 %v332, %v311
        %v336 = vmax.f32 %v333, %v317
        %340 = vrot.lane.b32.xlu0 %v305, 64
        %v341 = vpop.permute.xlu0 %340
        %342 = vrot.lane.b32.xlu0 %v311, 64
        %v343 = vpop.permute.xlu0 %342
        %344 = vrot.lane.b32.xlu0 %v317, 64
        %v345 = vpop.permute.xlu0 %344
        %v349 = vmax.f32 %v334, %v341
        %v350 = vmax.f32 %v335, %v343
        %v351 = vmax.f32 %v336, %v345
        %vm352 = vcmask 519168
        %353 = vst.msk [vmem:[%s207] sm:$0xf] %vm352, %v349
        %vm354 = vcmask 523268
        %355 = vst.msk [vmem:[%s214 - $0x4] sm:$0xf0] %vm354, %v349
        %vm356 = vcmask 523264
        %357 = vst.msk [vmem:[%s214 + $0x4] sm:$0xff] %vm356, %v350
        %358 = vst.msk [vmem:[%s214 + $0xc] sm:$0xf] %vm352, %v351
        %s359 = sand.u32 %s80, 1
        %s360 = scalar_lea.sflag [#allocation4], %s359
        %s361 = sand.u32 %s80, 1
        %s362 = smul.addr %s361, 4
        %s363 = scalar_lea.vmem [#allocation7], %s362
        %s364 = sand.u32 %s106, 1
        %s365 = scalar_lea.sflag [#allocation9], %s364
        %s366 = sand.u32 %s106, 1
        %s367 = smul.addr %s366, 16
        %s368 = scalar_lea.vmem [#allocation8], %s367
        // Predicated region
        $region37: #{self_attention.2} parent=27 // pred_check
          %p369 = pneg %p90
        $region38: #{self_attention.2} parent=27 // pred_check_branch
          %371 = sbr.rel (%p369) target = $region40
        $region39: #{self_attention.2} parent=27 // pred_region
          %s373 = ssub.s32 64, 64
          %374 = vsyncadd %s360, %s373
          %s375 = smul.addr %s25, 64
          %s376 = scalar_lea.hbm %s2, %s375
          %s378 = sshll.u32 %s363, 4
          %s379 = int_to_ptr.vmem [resolvable:$true] %s378
          %381 = dma.vmem_to_hbm [thread:$0]  %s379, 64, %s376, %s360
        $region40: #{self_attention.2} parent=27 // pred_fallthru
          _
        // Predicated region
        $region41: #{self_attention.2} parent=27 // pred_check
          %p382 = pneg %p116
        $region42: #{self_attention.2} parent=27 // pred_check_branch
          %384 = sbr.rel (%p382) target = $region44
        $region43: #{self_attention.2} parent=27 // pred_region
          %s386 = ssub.s32 256, 256
          %387 = vsyncadd %s365, %s386
          %s388 = smul.addr %s25, 2
          %s389 = smul.addr %s388, 128
          %s390 = scalar_lea.hbm %s3, %s389
          %s391 = sshll.u32 %s368, 4
          %s392 = int_to_ptr.vmem [resolvable:$true] %s391
          %397 = dma.vmem_to_hbm [thread:$0]  %s392, 256, %s390, %s365, 128, 128, 8
        $region44: #{self_attention.2} parent=27 // pred_fallthru
          _
      $region28: #{self_attention.2} parent=5 // pred_fallthru
        _
      %p398 = scmp.le.s32.totalorder 2, %s20
      // Predicated region
      $region45: #{self_attention.2} parent=5 // pred_check
        %p399 = pneg %p398
      $region46: #{self_attention.2} parent=5 // pred_check_branch
        %401 = sbr.rel (%p399) target = $region48
      $region47: #{self_attention.2} parent=5 // pred_region
        %s402 = ssub.s32 %s20, 2
        // Predicated region
        $region49: #{self_attention.2} parent=47 // pred_check
          %p403 = pneg %p96
        $region50: #{self_attention.2} parent=47 // pred_check_branch
          %405 = sbr.rel (%p403) target = $region52
        $region51: #{self_attention.2} parent=47 // pred_region
          %s406 = sand.u32 %s81, 1
          %s407 = scalar_lea.sflag [#allocation4], %s406
          %s408 = sand.u32 %s81, 1
          %s409 = smul.addr %s408, 4
          %s410 = scalar_lea.vmem [#allocation7], %s409
          %411 = dma.done %s407, 64
        $region52: #{self_attention.2} parent=47 // pred_fallthru
          _
        // Predicated region
        $region53: #{self_attention.2} parent=47 // pred_check
          %p412 = pneg %p122
        $region54: #{self_attention.2} parent=47 // pred_check_branch
          %414 = sbr.rel (%p412) target = $region56
        $region55: #{self_attention.2} parent=47 // pred_region
          %s415 = sand.u32 %s107, 1
          %s416 = scalar_lea.sflag [#allocation9], %s415
          %s417 = sand.u32 %s107, 1
          %s418 = smul.addr %s417, 16
          %s419 = scalar_lea.vmem [#allocation8], %s418
          %420 = dma.done %s416, 256
        $region56: #{self_attention.2} parent=47 // pred_fallthru
          _
      $region48: #{self_attention.2} parent=5 // pred_fallthru
        _
    $region6: #{self_attention.2} parent=1 // loop_footer
      %s24 = sadd.s32 1, %s20
    $region7: #{self_attention.2} parent=1 // loop_footer_branch
      %19 = sbr.rel target = $region3
    $region8: #{self_attention.2} parent=1 // loop_exit
      _
    %421 = vsyncpa [#allocation3], 1
    %s422 = scalar_lea.sflag [#allocation3], 1
    %423 = vsyncpa %s422, 1
    %424 = vsyncpa [#allocation6], 1
    %425 = vsyncpa [#allocation4], 1
    %s426 = scalar_lea.sflag [#allocation4], 1
    %427 = vsyncpa %s426, 1
    %428 = vsyncpa [#allocation9], 1
    %s429 = scalar_lea.sflag [#allocation9], 1
    %430 = vsyncpa %s429, 1

// kernel: self_attention.3
$region0: #{self_attention.3}
  #allocation0 [shape = 'u32[]', space=smem, size = 0x4, offset = 0x4, fixed_abs, tag = 'smem constant byte address 0x4 - core index']
  #allocation1 [shape = 'u32[144,128]{1,0:T(1,128)}', space=vmem, size = 0x12000, scoped, tag = 'internal scratch']
  #allocation2 [shape = 'f32[1]{0:T(128)S(6)}', space=smem, size = 0x200, scoped, tag = 'scoped memory for self_attention.3']
  %s0 = inlined_call_operand.hbm [shape: f32[2,32,256], index: 0, kind: input, shape index: {}]
  %s1 = inlined_call_operand.hbm [shape: f32[2,4,64], index: 1, kind: input, shape index: {}]
  %s2 = inlined_call_operand.hbm [shape: f32[2,16,64], index: 2, kind: input, shape index: {}]
  %s3 = inlined_call_operand.hbm [shape: f32[4,32], index: 3, kind: input, shape index: {}]
  %s4 = inlined_call_operand.hbm [shape: f32[32,16], index: 4, kind: input, shape index: {}]
  %s5 = inlined_call_operand.<no memory space> [shape: f32[1], index: 5, kind: input, shape index: {}]
  %s6 = inlined_call_operand.hbm [shape: f32[2,32,256], index: 6, kind: output, shape index: {}]
  %s7 = sld [smem:[#allocation0]]
  $region77: #{self_attention.3} parent=0
    _
  %s9 = ssub.s32 1, %s7
  %s10 = scalar_select 0, %s9, %s7
  %11 = sst [smem:[#allocation2]] %s5
  $region1: #{self_attention.3} parent=0
    #allocation3 [shape = 'u8[65536]{0}', space=vmem, size = 0x10000, scoped, tag = 'input window, operand 0']
    #allocation4 [shape = 's32[2]{0}', space=sflag, size = 0x8, scoped, tag = 'scoped memory for self_attention.3']
    #allocation5 [shape = 's32[2]{0}', space=sflag, size = 0x8, scoped, tag = 'scoped memory for self_attention.3']
    #allocation6 [shape = 'u8[4096]{0}', space=vmem, size = 0x1000, scoped, tag = 'input window, operand 1']
    #allocation7 [shape = 's32[2]{0}', space=sflag, size = 0x8, scoped, tag = 'scoped memory for self_attention.3']
    #allocation8 [shape = 'u8[16384]{0}', space=vmem, size = 0x4000, scoped, tag = 'input window, operand 2']
    #allocation9 [shape = 'u8[2048]{0}', space=vmem, size = 0x800, scoped, tag = 'input window, operand 3, single buffered']
    #allocation10 [shape = 's32[1]{0}', space=sflag, size = 0x4, scoped, tag = 'scoped memory for self_attention.3']
    #allocation11 [shape = 'u8[16384]{0}', space=vmem, size = 0x4000, scoped, tag = 'input window, operand 4, single buffered']
    #allocation12 [shape = 'u8[65536]{0}', space=vmem, size = 0x10000, scoped, tag = 'output window, operand 0']
    %12 = vsyncpa [#allocation4], 0
    %s13 = scalar_lea.sflag [#allocation4], 1
    %14 = vsyncpa %s13, 0
    %15 = vsyncpa [#allocation7], 0
    %s16 = scalar_lea.sflag [#allocation7], 1
    %17 = vsyncpa %s16, 0
    %18 = vsyncpa [#allocation10], 0
    %19 = vsyncpa [#allocation5], 0
    %s20 = scalar_lea.sflag [#allocation5], 1
    %21 = vsyncpa %s20, 0
    loop: start=0, step=1, limit=4
    $region2: #{self_attention.3} parent=1 // loop_pre_header
      _
    $region3: #{self_attention.3} parent=1 // loop_header
      %s23 = sphi 0, %s27
      %p24 = scmp.ge.s32.totalorder %s23, 4
      %s30 = sphi 0, %s42
      %s31 = sphi 0, %s38
      %s32 = sphi 0, %s30
      %s33 = sphi 0, %s31
      %s34 = sphi 0, %s32
      %s35 = sphi 0, %s33
      %s47 = sphi 0, %s49
      %s50 = sphi 0, %s47
      %s51 = sphi 0, %s50
      %s67 = sphi 0, %s51
      %s73 = sphi 0, %s75
      %s76 = sphi 0, %s73
      %s77 = sphi 0, %s76
      %s93 = sphi 0, %s77
      %s99 = sphi 0, %s101
      %s102 = sphi 0, %s99
      %s103 = sphi 0, %s102
      %s119 = sphi 0, %s103
      %s123 = sphi 0, %s123
      %s125 = sphi 0, %s123
      %s126 = sphi 0, %s125
      %s140 = sphi 0, %s126
      %s144 = sphi 0, %s144
      %s146 = sphi 0, %s144
      %s147 = sphi 0, %s146
      %s161 = sphi 0, %s147
      %s165 = sphi 0, %s165
      %s167 = sphi 0, %s165
      %s168 = sphi 0, %s167
      %s182 = sphi 0, %s168
      %s190 = sphi 0, %s192
      %s193 = sphi 0, %s190
      %s194 = sphi 0, %s193
      %s210 = sphi 0, %s194
    $region4: #{self_attention.3} parent=1 // loop_header_branch
      %26 = sbr.rel (%p24) target = $region8
    $region5: #{self_attention.3} parent=1 // loop_body
      %s28 = ssub.s32 %s23, 1
      %s29 = ssub.s32 %s23, 2
      %s36 = sadd.s32 1, %s31
      %p37 = scmp.ge.s32.totalorder %s36, 1
      %s38 = scalar_select %p37, 0, %s36
      %s39 = sadd.s32 1, %s30
      %s40 = scalar_select %p37, %s39, %s30
      %p41 = scmp.ge.s32.totalorder %s40, 2
      %s42 = scalar_select %p41, 0, %s40
      %s43 = ssub.s32 %s30, %s42
      %s44 = ssub.s32 %s31, %s38
      %s45 = sor.u32 %s43, %s44
      %p46 = scmp.eq.s32.totalorder %s45, 0
      %s48 = sadd.s32 %s47, 1
      %s49 = scalar_select %p46, %s47, %s48
      %p52 = pneg %p46
      %p53 = scmp.eq.s32.totalorder %s23, 1
      %p54 = por %p52, %p53
      %p55 = scmp.ne.s32.totalorder %s47, %s50
      %p56 = scmp.eq.s32.totalorder %s23, 0
      %p57 = por %p55, %p56
      %p58 = scmp.ne.s32.totalorder %s47, %s50
      %p59 = scmp.eq.s32.totalorder %s28, 1
      %p60 = por %p58, %p59
      %p61 = scmp.ne.s32.totalorder %s50, %s51
      %p62 = scmp.eq.s32.totalorder %s28, 0
      %p63 = por %p61, %p62
      %p64 = scmp.ne.s32.totalorder %s50, %s51
      %p65 = scmp.eq.s32.totalorder %s29, 1
      %p66 = por %p64, %p65
      %p68 = scmp.ne.s32.totalorder %s51, %s67
      %p69 = scmp.eq.s32.totalorder %s29, 0
      %p70 = por %p68, %p69
      %s71 = ssub.s32 %s30, %s42
      %p72 = scmp.eq.s32.totalorder %s71, 0
      %s74 = sadd.s32 %s73, 1
      %s75 = scalar_select %p72, %s73, %s74
      %p78 = pneg %p72
      %p79 = scmp.eq.s32.totalorder %s23, 1
      %p80 = por %p78, %p79
      %p81 = scmp.ne.s32.totalorder %s73, %s76
      %p82 = scmp.eq.s32.totalorder %s23, 0
      %p83 = por %p81, %p82
      %p84 = scmp.ne.s32.totalorder %s73, %s76
      %p85 = scmp.eq.s32.totalorder %s28, 1
      %p86 = por %p84, %p85
      %p87 = scmp.ne.s32.totalorder %s76, %s77
      %p88 = scmp.eq.s32.totalorder %s28, 0
      %p89 = por %p87, %p88
      %p90 = scmp.ne.s32.totalorder %s76, %s77
      %p91 = scmp.eq.s32.totalorder %s29, 1
      %p92 = por %p90, %p91
      %p94 = scmp.ne.s32.totalorder %s77, %s93
      %p95 = scmp.eq.s32.totalorder %s29, 0
      %p96 = por %p94, %p95
      %s97 = ssub.s32 %s30, %s42
      %p98 = scmp.eq.s32.totalorder %s97, 0
      %s100 = sadd.s32 %s99, 1
      %s101 = scalar_select %p98, %s99, %s100
      %p104 = pneg %p98
      %p105 = scmp.eq.s32.totalorder %s23, 1
      %p106 = por %p104, %p105
      %p107 = scmp.ne.s32.totalorder %s99, %s102
      %p108 = scmp.eq.s32.totalorder %s23, 0
      %p109 = por %p107, %p108
      %p110 = scmp.ne.s32.totalorder %s99, %s102
      %p111 = scmp.eq.s32.totalorder %s28, 1
      %p112 = por %p110, %p111
      %p113 = scmp.ne.s32.totalorder %s102, %s103
      %p114 = scmp.eq.s32.totalorder %s28, 0
      %p115 = por %p113, %p114
      %p116 = scmp.ne.s32.totalorder %s102, %s103
      %p117 = scmp.eq.s32.totalorder %s29, 1
      %p118 = por %p116, %p117
      %p120 = scmp.ne.s32.totalorder %s103, %s119
      %p121 = scmp.eq.s32.totalorder %s29, 0
      %p122 = por %p120, %p121
      %s124 = sadd.s32 %s123, 1
      %p127 = scmp.eq.s32.totalorder %s23, 1
      %p128 = scmp.ne.s32.totalorder %s123, %s125
      %p129 = scmp.eq.s32.totalorder %s23, 0
      %p130 = por %p128, %p129
      %p131 = scmp.ne.s32.totalorder %s123, %s125
      %p132 = scmp.eq.s32.totalorder %s28, 1
      %p133 = por %p131, %p132
      %p134 = scmp.ne.s32.totalorder %s125, %s126
      %p135 = scmp.eq.s32.totalorder %s28, 0
      %p136 = por %p134, %p135
      %p137 = scmp.ne.s32.totalorder %s125, %s126
      %p138 = scmp.eq.s32.totalorder %s29, 1
      %p139 = por %p137, %p138
      %p141 = scmp.ne.s32.totalorder %s126, %s140
      %p142 = scmp.eq.s32.totalorder %s29, 0
      %p143 = por %p141, %p142
      %s145 = sadd.s32 %s144, 1
      %p148 = scmp.eq.s32.totalorder %s23, 1
      %p149 = scmp.ne.s32.totalorder %s144, %s146
      %p150 = scmp.eq.s32.totalorder %s23, 0
      %p151 = por %p149, %p150
      %p152 = scmp.ne.s32.totalorder %s144, %s146
      %p153 = scmp.eq.s32.totalorder %s28, 1
      %p154 = por %p152, %p153
      %p155 = scmp.ne.s32.totalorder %s146, %s147
      %p156 = scmp.eq.s32.totalorder %s28, 0
      %p157 = por %p155, %p156
      %p158 = scmp.ne.s32.totalorder %s146, %s147
      %p159 = scmp.eq.s32.totalorder %s29, 1
      %p160 = por %p158, %p159
      %p162 = scmp.ne.s32.totalorder %s147, %s161
      %p163 = scmp.eq.s32.totalorder %s29, 0
      %p164 = por %p162, %p163
      %s166 = sadd.s32 %s165, 1
      %p169 = scmp.eq.s32.totalorder %s23, 1
      %p170 = scmp.ne.s32.totalorder %s165, %s167
      %p171 = scmp.eq.s32.totalorder %s23, 0
      %p172 = por %p170, %p171
      %p173 = scmp.ne.s32.totalorder %s165, %s167
      %p174 = scmp.eq.s32.totalorder %s28, 1
      %p175 = por %p173, %p174
      %p176 = scmp.ne.s32.totalorder %s167, %s168
      %p177 = scmp.eq.s32.totalorder %s28, 0
      %p178 = por %p176, %p177
      %p179 = scmp.ne.s32.totalorder %s167, %s168
      %p180 = scmp.eq.s32.totalorder %s29, 1
      %p181 = por %p179, %p180
      %p183 = scmp.ne.s32.totalorder %s168, %s182
      %p184 = scmp.eq.s32.totalorder %s29, 0
      %p185 = por %p183, %p184
      %s186 = ssub.s32 %s30, %s42
      %s187 = ssub.s32 %s31, %s38
      %s188 = sor.u32 %s186, %s187
      %p189 = scmp.eq.s32.totalorder %s188, 0
      %s191 = sadd.s32 %s190, 1
      %s192 = scalar_select %p189, %s190, %s191
      %p195 = pneg %p189
      %p196 = scmp.eq.s32.totalorder %s23, 1
      %p197 = por %p195, %p196
      %p198 = scmp.ne.s32.totalorder %s190, %s193
      %p199 = scmp.eq.s32.totalorder %s23, 0
      %p200 = por %p198, %p199
      %p201 = scmp.ne.s32.totalorder %s190, %s193
      %p202 = scmp.eq.s32.totalorder %s28, 1
      %p203 = por %p201, %p202
      %p204 = scmp.ne.s32.totalorder %s193, %s194
      %p205 = scmp.eq.s32.totalorder %s28, 0
      %p206 = por %p204, %p205
      %p207 = scmp.ne.s32.totalorder %s193, %s194
      %p208 = scmp.eq.s32.totalorder %s29, 1
      %p209 = por %p207, %p208
      %p211 = scmp.ne.s32.totalorder %s194, %s210
      %p212 = scmp.eq.s32.totalorder %s29, 0
      %p213 = por %p211, %p212
      %p214 = scmp.le.s32.totalorder 1, %s23
      %p215 = scmp.lt.s32.totalorder %s23, 3
      %p216 = pnand %p214, %p215
      %p217 = pneg %p216
      // Predicated region
      $region9: #{self_attention.3} parent=5 // pred_check
        _
      $region10: #{self_attention.3} parent=5 // pred_check_branch
        %219 = sbr.rel (%p216) target = $region12
      $region11: #{self_attention.3} parent=5 // pred_region
        %s220 = ssub.s32 %s23, 1
        // Predicated region
        $region13: #{self_attention.3} parent=11 // pred_check
          %p221 = pneg %p136
        $region14: #{self_attention.3} parent=11 // pred_check_branch
          %223 = sbr.rel (%p221) target = $region16
        $region15: #{self_attention.3} parent=11 // pred_region
          %s225 = ssub.s32 64, 64
          %226 = vsyncadd [#allocation10], %s225
          %s228 = sshll.u32 [#allocation9], 4
          %s229 = int_to_ptr.vmem [resolvable:$true] %s228
          %231 = dma.hbm_to_vmem [thread:$0]  %s3, 64, %s229, [#allocation10]
        $region16: #{self_attention.3} parent=11 // pred_fallthru
          _
        // Predicated region
        $region17: #{self_attention.3} parent=11 // pred_check
          %p232 = pneg %p157
        $region18: #{self_attention.3} parent=11 // pred_check_branch
          %234 = sbr.rel (%p232) target = $region20
        $region19: #{self_attention.3} parent=11 // pred_region
          %s236 = ssub.s32 512, 512
          %237 = vsyncadd [#allocation10], %s236
          %s238 = sshll.u32 [#allocation11], 4
          %s239 = int_to_ptr.vmem [resolvable:$true] %s238
          %244 = dma.hbm_to_vmem [thread:$0]  %s4, 512, %s239, [#allocation10], 128, 128, 8
        $region20: #{self_attention.3} parent=11 // pred_fallthru
          _
        // Predicated region
        $region21: #{self_attention.3} parent=11 // pred_check
          %p245 = pneg %p178
        $region22: #{self_attention.3} parent=11 // pred_check_branch
          %247 = sbr.rel (%p245) target = $region24
        $region23: #{self_attention.3} parent=11 // pred_region
          _
        $region24: #{self_attention.3} parent=11 // pred_fallthru
          _
      $region12: #{self_attention.3} parent=5 // pred_fallthru
        _
      %p248 = scmp.lt.s32.totalorder %s23, 2
      // Predicated region
      $region25: #{self_attention.3} parent=5 // pred_check
        %p249 = pneg %p248
      $region26: #{self_attention.3} parent=5 // pred_check_branch
        %251 = sbr.rel (%p249) target = $region28
      $region27: #{self_attention.3} parent=5 // pred_region
        // Predicated region
        $region29: #{self_attention.3} parent=27 // pred_check
          %p252 = pneg %p57
        $region30: #{self_attention.3} parent=27 // pred_check_branch
          %254 = sbr.rel (%p252) target = $region32
        $region31: #{self_attention.3} parent=27 // pred_region
          %s255 = sand.u32 %s47, 1
          %s256 = scalar_lea.sflag [#allocation4], %s255
          %s257 = sand.u32 %s47, 1
          %s258 = smul.addr %s257, 64
          %s259 = scalar_lea.vmem [#allocation3], %s258
          %s260 = smul.u32 2, %s31
          %s262 = ssub.s32 1024, 1024
          %263 = vsyncadd %s256, %s262
          %s264 = smul.addr %s30, 8
          %s265 = sadd.s32 %s260, %s264
          %s266 = smul.addr %s265, 128
          %s267 = scalar_lea.hbm %s0, %s266
          %s268 = sshll.u32 %s259, 4
          %s269 = int_to_ptr.vmem [resolvable:$true] %s268
          %274 = dma.hbm_to_vmem [thread:$0]  %s267, 1024, %s269, %s256, 256, 256, 16
        $region32: #{self_attention.3} parent=27 // pred_fallthru
          _
        // Predicated region
        $region33: #{self_attention.3} parent=27 // pred_check
          %p275 = pneg %p83
        $region34: #{self_attention.3} parent=27 // pred_check_branch
          %277 = sbr.rel (%p275) target = $region36
        $region35: #{self_attention.3} parent=27 // pred_region
          %s278 = sand.u32 %s23, 1
          %s279 = scalar_lea.sflag [#allocation7], %s278
          %s280 = sand.u32 %s73, 1
          %s281 = smul.addr %s280, 4
          %s282 = scalar_lea.vmem [#allocation6], %s281
          %s284 = ssub.s32 64, 64
          %285 = vsyncadd %s279, %s284
          %s286 = smul.addr %s30, 64
          %s287 = scalar_lea.hbm %s1, %s286
          %s289 = sshll.u32 %s282, 4
          %s290 = int_to_ptr.vmem [resolvable:$true] %s289
          %292 = dma.hbm_to_vmem [thread:$0]  %s287, 64, %s290, %s279
        $region36: #{self_attention.3} parent=27 // pred_fallthru
          _
        // Predicated region
        $region37: #{self_attention.3} parent=27 // pred_check
          %p293 = pneg %p109
        $region38: #{self_attention.3} parent=27 // pred_check_branch
          %295 = sbr.rel (%p293) target = $region40
        $region39: #{self_attention.3} parent=27 // pred_region
          %s296 = sand.u32 %s23, 1
          %s297 = scalar_lea.sflag [#allocation7], %s296
          %s298 = sand.u32 %s99, 1
          %s299 = smul.addr %s298, 16
          %s300 = scalar_lea.vmem [#allocation8], %s299
          %s302 = ssub.s32 256, 256
          %303 = vsyncadd %s297, %s302
          %s304 = smul.addr %s30, 2
          %s305 = smul.addr %s304, 128
          %s306 = scalar_lea.hbm %s2, %s305
          %s307 = sshll.u32 %s300, 4
          %s308 = int_to_ptr.vmem [resolvable:$true] %s307
          %313 = dma.hbm_to_vmem [thread:$0]  %s306, 256, %s308, %s297, 128, 128, 8
        $region40: #{self_attention.3} parent=27 // pred_fallthru
          _
      $region28: #{self_attention.3} parent=5 // pred_fallthru
        _
      %p314 = scmp.le.s32.totalorder 1, %s23
      %p315 = scmp.lt.s32.totalorder %s23, 3
      %p316 = pnand %p314, %p315
      %p317 = pneg %p316
      // Predicated region
      $region41: #{self_attention.3} parent=5 // pred_check
        _
      $region42: #{self_attention.3} parent=5 // pred_check_branch
        %319 = sbr.rel (%p316) target = $region44
      $region43: #{self_attention.3} parent=5 // pred_region
        %s320 = ssub.s32 %s23, 1
        %s321 = sand.u32 %s50, 1
        %s322 = scalar_lea.sflag [#allocation4], %s321
        %s323 = sand.u32 %s50, 1
        %s324 = smul.addr %s323, 64
        %s325 = scalar_lea.vmem [#allocation3], %s324
        // Predicated region
        $region45: #{self_attention.3} parent=43 // pred_check
          %p326 = pneg %p63
        $region46: #{self_attention.3} parent=43 // pred_check_branch
          %328 = sbr.rel (%p326) target = $region48
        $region47: #{self_attention.3} parent=43 // pred_region
          %329 = dma.done %s322, 1024
        $region48: #{self_attention.3} parent=43 // pred_fallthru
          _
        %s330 = sand.u32 %s28, 1
        %s331 = scalar_lea.sflag [#allocation7], %s330
        %s332 = sand.u32 %s76, 1
        %s333 = smul.addr %s332, 4
        %s334 = scalar_lea.vmem [#allocation6], %s333
        // Predicated region
        $region49: #{self_attention.3} parent=43 // pred_check
          %p335 = pneg %p89
        $region50: #{self_attention.3} parent=43 // pred_check_branch
          %337 = sbr.rel (%p335) target = $region52
        $region51: #{self_attention.3} parent=43 // pred_region
          %338 = dma.done %s331, 64
        $region52: #{self_attention.3} parent=43 // pred_fallthru
          _
        %s339 = sand.u32 %s28, 1
        %s340 = scalar_lea.sflag [#allocation7], %s339
        %s341 = sand.u32 %s102, 1
        %s342 = smul.addr %s341, 16
        %s343 = scalar_lea.vmem [#allocation8], %s342
        // Predicated region
        $region53: #{self_attention.3} parent=43 // pred_check
          %p344 = pneg %p115
        $region54: #{self_attention.3} parent=43 // pred_check_branch
          %346 = sbr.rel (%p344) target = $region56
        $region55: #{self_attention.3} parent=43 // pred_region
          %347 = dma.done %s340, 256
        $region56: #{self_attention.3} parent=43 // pred_fallthru
          _
        // Predicated region
        $region57: #{self_attention.3} parent=43 // pred_check
          %p348 = pneg %p136
        $region58: #{self_attention.3} parent=43 // pred_check_branch
          %350 = sbr.rel (%p348) target = $region60
        $region59: #{self_attention.3} parent=43 // pred_region
          %351 = dma.done [#allocation10], 64
        $region60: #{self_attention.3} parent=43 // pred_fallthru
          _
        // Predicated region
        $region61: #{self_attention.3} parent=43 // pred_check
          %p352 = pneg %p157
        $region62: #{self_attention.3} parent=43 // pred_check_branch
          %354 = sbr.rel (%p352) target = $region64
        $region63: #{self_attention.3} parent=43 // pred_region
          %355 = dma.done [#allocation10], 512
        $region64: #{self_attention.3} parent=43 // pred_fallthru
          _
        %s356 = sand.u32 %s50, 1
        %s357 = scalar_lea.sflag [#allocation4], %s356
        %s358 = sand.u32 %s50, 1
        %s359 = smul.addr %s358, 64
        %s360 = scalar_lea.vmem [#allocation3], %s359
        %p361 = pneg %p63
        %p362 = pneg %p60
        %s363 = sand.u32 %s28, 1
        %s364 = scalar_lea.sflag [#allocation7], %s363
        %s365 = sand.u32 %s76, 1
        %s366 = smul.addr %s365, 4
        %s367 = scalar_lea.vmem [#allocation6], %s366
        %p368 = pneg %p89
        %p369 = pneg %p86
        %s370 = sand.u32 %s28, 1
        %s371 = scalar_lea.sflag [#allocation7], %s370
        %s372 = sand.u32 %s102, 1
        %s373 = smul.addr %s372, 16
        %s374 = scalar_lea.vmem [#allocation8], %s373
        %p375 = pneg %p115
        %p376 = pneg %p112
        %p377 = pneg %p136
        %p378 = pneg %p133
        %p379 = pneg %p157
        %p380 = pneg %p154
        %p381 = pneg %p178
        %p382 = pneg %p175
        %p383 = pneg %p206
        %p384 = pneg %p203
        %s385 = sand.u32 %s193, 1
        %s386 = scalar_lea.sflag [#allocation5], %s385
        %s387 = sand.u32 %s193, 1
        %s388 = smul.addr %s387, 64
        %s389 = scalar_lea.vmem [#allocation12], %s388
        %s390 = smul.u32 2, %s33
        %s391 = smul.u32 2, %s33
        %v392 = vld [vmem:[%s325] sm:$0xff]
        %v393 = vld [vmem:[%s325 + $0x8] sm:$0xff]
        %v394 = vld [vmem:[%s325 + $0x10] sm:$0xff]
        %v395 = vld [vmem:[%s325 + $0x18] sm:$0xff]
        %v396 = vld [vmem:[%s325 + $0x20] sm:$0xff]
        %v397 = vld [vmem:[%s325 + $0x28] sm:$0xff]
        %v398 = vld [vmem:[%s325 + $0x30] sm:$0xff]
        %v399 = vld [vmem:[%s325 + $0x38] sm:$0xff]
        %v400 = vld [vmem:[#allocation9] sm:$0xf]
        %vm401 = vcmask 261120
        %v403 = vsel %vm401, %v400, 0
        %405 = vmatprep.subr.mxu0 %v393
        %406 = vmatpush1.msra.mxu0 %v392
        %407 = vmatprep.subr.mxu0 %v395
        %408 = vmatpush1.msra.mxu0 %v394
        %409 = vmatprep.subr.mxu0 %v397
        %410 = vmatpush1.msra.mxu0 %v396
        %411 = vmatprep.subr.mxu0 %v399
        %412 = vmatpush1.msra.mxu0 %v398
        %413 = vmatprep.subr.mxu0 0.0
        %414 = vmatpush1.msra.mxu0 0.0
        %415 = vmatprep.subr.mxu0 0.0
        %416 = vmatpush1.msra.mxu0 0.0
        %417 = vmatprep.subr.mxu0 0.0
        %418 = vmatpush1.msra.mxu0 0.0
        %419 = vmatprep.subr.mxu0 0.0
        %420 = vmatpush1.msra.mxu0 0.0
        %421 = vmatprep.subr.mxu0 0.0
        %422 = vmatpush1.msra.mxu0 0.0
        %423 = vmatprep.subr.mxu0 0.0
        %424 = vmatpush1.msra.mxu0 0.0
        %425 = vmatprep.subr.mxu0 0.0
        %426 = vmatpush1.msra.mxu0 0.0
        %427 = vmatprep.subr.mxu0 0.0
        %428 = vmatpush1.msra.mxu0 0.0
        %429 = vmatprep.subr.mxu0 0.0
        %430 = vmatpush1.msra.mxu0 0.0
        %431 = vmatprep.subr.mxu0 0.0
        %432 = vmatpush1.msra.mxu0 0.0
        %433 = vmatprep.subr.mxu0 0.0
        %434 = vmatpush1.msra.mxu0 0.0
        %435 = vmatprep.subr.mxu0 0.0
        %436 = vmatpush1.msra.mxu0 0.0
        %437 = vmatprep.subr.mxu0 0.0
        %438 = vmatpush1.msra.mxu0 0.0
        %439 = vmatprep.subr.mxu0 0.0
        %440 = vmatpush1.msra.mxu0 0.0
        %441 = vmatprep.subr.mxu0 0.0
        %442 = vmatpush1.msra.mxu0 0.0
        %443 = vmatprep.subr.mxu0 0.0
        %444 = vmatpush1.msra.mxu0 0.0
        %445 = vmatprep.subr.mxu0 0.0
        %446 = vmatpush1.msra.mxu0 0.0
        %447 = vmatprep.subr.mxu0 0.0
        %448 = vmatpush1.msra.mxu0 0.0
        %449 = vmatprep.subr.mxu0 0.0
        %450 = vmatpush1.msra.mxu0 0.0
        %451 = vmatprep.subr.mxu0 0.0
        %452 = vmatpush1.msra.mxu0 0.0
        %453 = vmatprep.subr.mxu0 0.0
        %454 = vmatpush1.msra.mxu0 0.0
        %455 = vmatprep.subr.mxu0 0.0
        %456 = vmatpush1.msra.mxu0 0.0
        %457 = vmatprep.subr.mxu0 0.0
        %458 = vmatpush1.msra.mxu0 0.0
        %459 = vmatprep.subr.mxu0 0.0
        %460 = vmatpush1.msra.mxu0 0.0
        %461 = vmatprep.subr.mxu0 0.0
        %462 = vmatpush1.msra.mxu0 0.0
        %463 = vmatprep.subr.mxu0 0.0
        %464 = vmatpush1.msra.mxu0 0.0
        %465 = vmatprep.subr.mxu0 0.0
        %466 = vmatpush1.msra.mxu0 0.0
        %467 = vmatprep.subr.mxu0 0.0
        %468 = vmatpush1.msra.mxu0 0.0
        %469 = vmatprep.mubr.f32.mxu0 0.0
        %470 = vmatmul.mubr.f32.gmra.mrb[0].mxu0 %v403
        %v471 = vpop.f32.mrb[0].mxu0
        %v472 = vadd.f32 0.0, %v471
        %v473 = vpop.f32.mrb[0].mxu0
        %v474 = vadd.f32 0.0, %v473
        %475 = vdwg.mxu0
        %v476 = vld [vmem:[%s334] sm:$0xf]
        %477 = vxpose.xlu0.b32.start [1/16] %v472, 128
        %478 = vxpose.xlu0.b32.cont [2/16] 0.0, 128
        %479 = vxpose.xlu0.b32.cont [3/16] 0.0, 128
        %480 = vxpose.xlu0.b32.cont [4/16] 0.0, 128
        %481 = vxpose.xlu0.b32.cont [5/16] 0.0, 128
        %482 = vxpose.xlu0.b32.cont [6/16] 0.0, 128
        %483 = vxpose.xlu0.b32.cont [7/16] 0.0, 128
        %484 = vxpose.xlu0.b32.cont [8/16] 0.0, 128
        %485 = vxpose.xlu0.b32.cont [9/16] 0.0, 128
        %486 = vxpose.xlu0.b32.cont [10/16] 0.0, 128
        %487 = vxpose.xlu0.b32.cont [11/16] 0.0, 128
        %488 = vxpose.xlu0.b32.cont [12/16] 0.0, 128
        %489 = vxpose.xlu0.b32.cont [13/16] 0.0, 128
        %490 = vxpose.xlu0.b32.cont [14/16] 0.0, 128
        %491 = vxpose.xlu0.b32.cont [15/16] 0.0, 128
        %492 = vxpose.xlu0.b32.end [16/16] 0.0, 128
        %v493 = vpop.trf.xlu0
        %v494 = vpop.trf.xlu0
        %v495 = vpop.trf.xlu0
        %v496 = vpop.trf.xlu0
        %v497 = vpop.trf.xlu0
        %v498 = vpop.trf.xlu0
        %v499 = vpop.trf.xlu0
        %v500 = vpop.trf.xlu0
        %v501 = vpop.trf.xlu0
        %v502 = vpop.trf.xlu0
        %v503 = vpop.trf.xlu0
        %v504 = vpop.trf.xlu0
        %v505 = vpop.trf.xlu0
        %v506 = vpop.trf.xlu0
        %v507 = vpop.trf.xlu0
        %v508 = vpop.trf.xlu0
        %509 = vxpose.xlu0.b32.start [1/16] %v474, 128
        %510 = vxpose.xlu0.b32.cont [2/16] 0.0, 128
        %511 = vxpose.xlu0.b32.cont [3/16] 0.0, 128
        %512 = vxpose.xlu0.b32.cont [4/16] 0.0, 128
        %513 = vxpose.xlu0.b32.cont [5/16] 0.0, 128
        %514 = vxpose.xlu0.b32.cont [6/16] 0.0, 128
        %515 = vxpose.xlu0.b32.cont [7/16] 0.0, 128
        %516 = vxpose.xlu0.b32.cont [8/16] 0.0, 128
        %517 = vxpose.xlu0.b32.cont [9/16] 0.0, 128
        %518 = vxpose.xlu0.b32.cont [10/16] 0.0, 128
        %519 = vxpose.xlu0.b32.cont [11/16] 0.0, 128
        %520 = vxpose.xlu0.b32.cont [12/16] 0.0, 128
        %521 = vxpose.xlu0.b32.cont [13/16] 0.0, 128
        %522 = vxpose.xlu0.b32.cont [14/16] 0.0, 128
        %523 = vxpose.xlu0.b32.cont [15/16] 0.0, 128
        %524 = vxpose.xlu0.b32.end [16/16] 0.0, 128
        %v525 = vpop.trf.xlu0
        %v526 = vpop.trf.xlu0
        %v527 = vpop.trf.xlu0
        %v528 = vpop.trf.xlu0
        %v529 = vpop.trf.xlu0
        %v530 = vpop.trf.xlu0
        %v531 = vpop.trf.xlu0
        %v532 = vpop.trf.xlu0
        %v533 = vpop.trf.xlu0
        %v534 = vpop.trf.xlu0
        %v535 = vpop.trf.xlu0
        %v536 = vpop.trf.xlu0
        %v537 = vpop.trf.xlu0
        %v538 = vpop.trf.xlu0
        %v539 = vpop.trf.xlu0
        %v540 = vpop.trf.xlu0
        %vm541 = vcmask 31744
        %v543 = vsel %vm541, %v493, 0
        %v546 = vsel %vm541, %v494, 0
        %v549 = vsel %vm541, %v495, 0
        %v552 = vsel %vm541, %v496, 0
        %v555 = vsel %vm541, %v497, 0
        %v558 = vsel %vm541, %v498, 0
        %v561 = vsel %vm541, %v499, 0
        %v564 = vsel %vm541, %v500, 0
        %v567 = vsel %vm541, %v501, 0
        %v570 = vsel %vm541, %v502, 0
        %v573 = vsel %vm541, %v503, 0
        %v576 = vsel %vm541, %v504, 0
        %v579 = vsel %vm541, %v505, 0
        %v582 = vsel %vm541, %v506, 0
        %v585 = vsel %vm541, %v507, 0
        %v588 = vsel %vm541, %v508, 0
        %v591 = vsel %vm541, %v525, 0
        %v594 = vsel %vm541, %v526, 0
        %v597 = vsel %vm541, %v527, 0
        %v600 = vsel %vm541, %v528, 0
        %v603 = vsel %vm541, %v529, 0
        %v606 = vsel %vm541, %v530, 0
        %v609 = vsel %vm541, %v531, 0
        %v612 = vsel %vm541, %v532, 0
        %v615 = vsel %vm541, %v533, 0
        %v618 = vsel %vm541, %v534, 0
        %v621 = vsel %vm541, %v535, 0
        %v624 = vsel %vm541, %v536, 0
        %v627 = vsel %vm541, %v537, 0
        %v630 = vsel %vm541, %v538, 0
        %v633 = vsel %vm541, %v539, 0
        %v636 = vsel %vm541, %v540, 0
        %vm638 = vcmask 1043456
        %v640 = vsel %vm638, %v476, 0
        %642 = vmatprep.subr.mxu0 0.0
        %643 = vmatpush1.msra.mxu0 %v640
        %644 = vmatprep.subr.mxu0 0.0
        %645 = vmatpush1.msra.mxu0 0.0
        %646 = vmatprep.subr.mxu0 0.0
        %647 = vmatpush1.msra.mxu0 0.0
        %648 = vmatprep.subr.mxu0 0.0
        %649 = vmatpush1.msra.mxu0 0.0
        %650 = vmatprep.subr.mxu0 0.0
        %651 = vmatpush1.msra.mxu0 0.0
        %652 = vmatprep.subr.mxu0 0.0
        %653 = vmatpush1.msra.mxu0 0.0
        %654 = vmatprep.subr.mxu0 0.0
        %655 = vmatpush1.msra.mxu0 0.0
        %656 = vmatprep.subr.mxu0 0.0
        %657 = vmatpush1.msra.mxu0 0.0
        %658 = vmatprep.subr.mxu0 0.0
        %659 = vmatpush1.msra.mxu0 0.0
        %660 = vmatprep.subr.mxu0 0.0
        %661 = vmatpush1.msra.mxu0 0.0
        %662 = vmatprep.subr.mxu0 0.0
        %663 = vmatpush1.msra.mxu0 0.0
        %664 = vmatprep.subr.mxu0 0.0
        %665 = vmatpush1.msra.mxu0 0.0
        %666 = vmatprep.subr.mxu0 0.0
        %667 = vmatpush1.msra.mxu0 0.0
        %668 = vmatprep.subr.mxu0 0.0
        %669 = vmatpush1.msra.mxu0 0.0
        %670 = vmatprep.subr.mxu0 0.0
        %671 = vmatpush1.msra.mxu0 0.0
        %672 = vmatprep.subr.mxu0 0.0
        %673 = vmatpush1.msra.mxu0 0.0
        %674 = vmatprep.subr.mxu0 0.0
        %675 = vmatpush1.msra.mxu0 0.0
        %676 = vmatprep.subr.mxu0 0.0
        %677 = vmatpush1.msra.mxu0 0.0
        %678 = vmatprep.subr.mxu0 0.0
        %679 = vmatpush1.msra.mxu0 0.0
        %680 = vmatprep.subr.mxu0 0.0
        %681 = vmatpush1.msra.mxu0 0.0
        %682 = vmatprep.subr.mxu0 0.0
        %683 = vmatpush1.msra.mxu0 0.0
        %684 = vmatprep.subr.mxu0 0.0
        %685 = vmatpush1.msra.mxu0 0.0
        %686 = vmatprep.subr.mxu0 0.0
        %687 = vmatpush1.msra.mxu0 0.0
        %688 = vmatprep.subr.mxu0 0.0
        %689 = vmatpush1.msra.mxu0 0.0
        %690 = vmatprep.subr.mxu0 0.0
        %691 = vmatpush1.msra.mxu0 0.0
        %692 = vmatprep.subr.mxu0 0.0
        %693 = vmatpush1.msra.mxu0 0.0
        %694 = vmatprep.subr.mxu0 0.0
        %695 = vmatpush1.msra.mxu0 0.0
        %696 = vmatprep.subr.mxu0 0.0
        %697 = vmatpush1.msra.mxu0 0.0
        %698 = vmatprep.subr.mxu0 0.0
        %699 = vmatpush1.msra.mxu0 0.0
        %700 = vmatprep.subr.mxu0 0.0
        %701 = vmatpush1.msra.mxu0 0.0
        %702 = vmatprep.subr.mxu0 0.0
        %703 = vmatpush1.msra.mxu0 0.0
        %704 = vmatprep.subr.mxu0 0.0
        %705 = vmatpush1.msra.mxu0 0.0
        %706 = vmatprep.mubr.f32.mxu0 0.0
        %707 = vmatmul.mubr.f32.gmra.mrb[0].mxu0 %v543
        %v708 = vpop.f32.mrb[0].mxu0
        %v709 = vadd.f32 0.0, %v708
        %v710 = vpop.f32.mrb[0].mxu0
        %711 = vmatprep.mubr.f32.mxu0 0.0
        %712 = vmatmul.mubr.f32.gmra.mrb[0].mxu0 %v546
        %v713 = vpop.f32.mrb[0].mxu0
        %v714 = vadd.f32 0.0, %v713
        %v715 = vpop.f32.mrb[0].mxu0
        %716 = vmatprep.mubr.f32.mxu0 0.0
        %717 = vmatmul.mubr.f32.gmra.mrb[0].mxu0 %v549
        %v718 = vpop.f32.mrb[0].mxu0
        %v719 = vadd.f32 0.0, %v718
        %v720 = vpop.f32.mrb[0].mxu0
        %721 = vmatprep.mubr.f32.mxu0 0.0
        %722 = vmatmul.mubr.f32.gmra.mrb[0].mxu0 %v552
        %v723 = vpop.f32.mrb[0].mxu0
        %v724 = vadd.f32 0.0, %v723
        %v725 = vpop.f32.mrb[0].mxu0
        %726 = vmatprep.mubr.f32.mxu0 0.0
        %727 = vmatmul.mubr.f32.gmra.mrb[0].mxu0 %v555
        %v728 = vpop.f32.mrb[0].mxu0
        %v729 = vadd.f32 0.0, %v728
        %v730 = vpop.f32.mrb[0].mxu0
        %731 = vmatprep.mubr.f32.mxu0 0.0
        %732 = vmatmul.mubr.f32.gmra.mrb[0].mxu0 %v558
        %v733 = vpop.f32.mrb[0].mxu0
        %v734 = vadd.f32 0.0, %v733
        %v735 = vpop.f32.mrb[0].mxu0
        %736 = vmatprep.mubr.f32.mxu0 0.0
        %737 = vmatmul.mubr.f32.gmra.mrb[0].mxu0 %v561
        %v738 = vpop.f32.mrb[0].mxu0
        %v739 = vadd.f32 0.0, %v738
        %v740 = vpop.f32.mrb[0].mxu0
        %741 = vmatprep.mubr.f32.mxu0 0.0
        %742 = vmatmul.mubr.f32.gmra.mrb[0].mxu0 %v564
        %v743 = vpop.f32.mrb[0].mxu0
        %v744 = vadd.f32 0.0, %v743
        %v745 = vpop.f32.mrb[0].mxu0
        %746 = vmatprep.mubr.f32.mxu0 0.0
        %747 = vmatmul.mubr.f32.gmra.mrb[0].mxu0 %v567
        %v748 = vpop.f32.mrb[0].mxu0
        %v749 = vadd.f32 0.0, %v748
        %v750 = vpop.f32.mrb[0].mxu0
        %751 = vmatprep.mubr.f32.mxu0 0.0
        %752 = vmatmul.mubr.f32.gmra.mrb[0].mxu0 %v570
        %v753 = vpop.f32.mrb[0].mxu0
        %v754 = vadd.f32 0.0, %v753
        %v755 = vpop.f32.mrb[0].mxu0
        %756 = vmatprep.mubr.f32.mxu0 0.0
        %757 = vmatmul.mubr.f32.gmra.mrb[0].mxu0 %v573
        %v758 = vpop.f32.mrb[0].mxu0
        %v759 = vadd.f32 0.0, %v758
        %v760 = vpop.f32.mrb[0].mxu0
        %761 = vmatprep.mubr.f32.mxu0 0.0
        %762 = vmatmul.mubr.f32.gmra.mrb[0].mxu0 %v576
        %v763 = vpop.f32.mrb[0].mxu0
        %v764 = vadd.f32 0.0, %v763
        %v765 = vpop.f32.mrb[0].mxu0
        %766 = vmatprep.mubr.f32.mxu0 0.0
        %767 = vmatmul.mubr.f32.gmra.mrb[0].mxu0 %v579
        %v768 = vpop.f32.mrb[0].mxu0
        %v769 = vadd.f32 0.0, %v768
        %v770 = vpop.f32.mrb[0].mxu0
        %771 = vmatprep.mubr.f32.mxu0 0.0
        %772 = vmatmul.mubr.f32.gmra.mrb[0].mxu0 %v582
        %v773 = vpop.f32.mrb[0].mxu0
        %v774 = vadd.f32 0.0, %v773
        %v775 = vpop.f32.mrb[0].mxu0
        %776 = vmatprep.mubr.f32.mxu0 0.0
        %777 = vmatmul.mubr.f32.gmra.mrb[0].mxu0 %v585
        %v778 = vpop.f32.mrb[0].mxu0
        %v779 = vadd.f32 0.0, %v778
        %v780 = vpop.f32.mrb[0].mxu0
        %781 = vmatprep.mubr.f32.mxu0 0.0
        %782 = vmatmul.mubr.f32.gmra.mrb[0].mxu0 %v588
        %v783 = vpop.f32.mrb[0].mxu0
        %v784 = vadd.f32 0.0, %v783
        %v785 = vpop.f32.mrb[0].mxu0
        %786 = vmatprep.mubr.f32.mxu0 0.0
        %787 = vmatmul.mubr.f32.gmra.mrb[0].mxu0 %v591
        %v788 = vpop.f32.mrb[0].mxu0
        %v789 = vadd.f32 0.0, %v788
        %v790 = vpop.f32.mrb[0].mxu0
        %791 = vmatprep.mubr.f32.mxu0 0.0
        %792 = vmatmul.mubr.f32.gmra.mrb[0].mxu0 %v594
        %v793 = vpop.f32.mrb[0].mxu0
        %v794 = vadd.f32 0.0, %v793
        %v795 = vpop.f32.mrb[0].mxu0
        %796 = vmatprep.mubr.f32.mxu0 0.0
        %797 = vmatmul.mubr.f32.gmra.mrb[0].mxu0 %v597
        %v798 = vpop.f32.mrb[0].mxu0
        %v799 = vadd.f32 0.0, %v798
        %v800 = vpop.f32.mrb[0].mxu0
        %801 = vmatprep.mubr.f32.mxu0 0.0
        %802 = vmatmul.mubr.f32.gmra.mrb[0].mxu0 %v600
        %v803 = vpop.f32.mrb[0].mxu0
        %v804 = vadd.f32 0.0, %v803
        %v805 = vpop.f32.mrb[0].mxu0
        %806 = vmatprep.mubr.f32.mxu0 0.0
        %807 = vmatmul.mubr.f32.gmra.mrb[0].mxu0 %v603
        %v808 = vpop.f32.mrb[0].mxu0
        %v809 = vadd.f32 0.0, %v808
        %v810 = vpop.f32.mrb[0].mxu0
        %811 = vmatprep.mubr.f32.mxu0 0.0
        %812 = vmatmul.mubr.f32.gmra.mrb[0].mxu0 %v606
        %v813 = vpop.f32.mrb[0].mxu0
        %v814 = vadd.f32 0.0, %v813
        %v815 = vpop.f32.mrb[0].mxu0
        %816 = vmatprep.mubr.f32.mxu0 0.0
        %817 = vmatmul.mubr.f32.gmra.mrb[0].mxu0 %v609
        %v818 = vpop.f32.mrb[0].mxu0
        %v819 = vadd.f32 0.0, %v818
        %v820 = vpop.f32.mrb[0].mxu0
        %821 = vmatprep.mubr.f32.mxu0 0.0
        %822 = vmatmul.mubr.f32.gmra.mrb[0].mxu0 %v612
        %v823 = vpop.f32.mrb[0].mxu0
        %v824 = vadd.f32 0.0, %v823
        %v825 = vpop.f32.mrb[0].mxu0
        %826 = vmatprep.mubr.f32.mxu0 0.0
        %827 = vmatmul.mubr.f32.gmra.mrb[0].mxu0 %v615
        %v828 = vpop.f32.mrb[0].mxu0
        %v829 = vadd.f32 0.0, %v828
        %v830 = vpop.f32.mrb[0].mxu0
        %831 = vmatprep.mubr.f32.mxu0 0.0
        %832 = vmatmul.mubr.f32.gmra.mrb[0].mxu0 %v618
        %v833 = vpop.f32.mrb[0].mxu0
        %v834 = vadd.f32 0.0, %v833
        %v835 = vpop.f32.mrb[0].mxu0
        %836 = vmatprep.mubr.f32.mxu0 0.0
        %837 = vmatmul.mubr.f32.gmra.mrb[0].mxu0 %v621
        %v838 = vpop.f32.mrb[0].mxu0
        %v839 = vadd.f32 0.0, %v838
        %v840 = vpop.f32.mrb[0].mxu0
        %841 = vmatprep.mubr.f32.mxu0 0.0
        %842 = vmatmul.mubr.f32.gmra.mrb[0].mxu0 %v624
        %v843 = vpop.f32.mrb[0].mxu0
        %v844 = vadd.f32 0.0, %v843
        %v845 = vpop.f32.mrb[0].mxu0
        %846 = vmatprep.mubr.f32.mxu0 0.0
        %847 = vmatmul.mubr.f32.gmra.mrb[0].mxu0 %v627
        %v848 = vpop.f32.mrb[0].mxu0
        %v849 = vadd.f32 0.0, %v848
        %v850 = vpop.f32.mrb[0].mxu0
        %851 = vmatprep.mubr.f32.mxu0 0.0
        %852 = vmatmul.mubr.f32.gmra.mrb[0].mxu0 %v630
        %v853 = vpop.f32.mrb[0].mxu0
        %v854 = vadd.f32 0.0, %v853
        %v855 = vpop.f32.mrb[0].mxu0
        %856 = vmatprep.mubr.f32.mxu0 0.0
        %857 = vmatmul.mubr.f32.gmra.mrb[0].mxu0 %v633
        %v858 = vpop.f32.mrb[0].mxu0
        %v859 = vadd.f32 0.0, %v858
        %v860 = vpop.f32.mrb[0].mxu0
        %861 = vmatprep.mubr.f32.mxu0 0.0
        %862 = vmatmul.mubr.f32.gmra.mrb[0].mxu0 %v636
        %v863 = vpop.f32.mrb[0].mxu0
        %v864 = vadd.f32 0.0, %v863
        %v865 = vpop.f32.mrb[0].mxu0
        %866 = vdwg.mxu0
        %vm867 = vcmask 523264
        %v868 = vsel %vm867, %v709, -inf
        %869 = vmax.xlane.f32.xlu0 %v868
        %v870 = vpop.xlane.xlu0 %869
        %v871 = vsel %vm867, %v714, -inf
        %872 = vmax.xlane.f32.xlu0 %v871
        %v873 = vpop.xlane.xlu0 %872
        %v874 = vsel %vm867, %v719, -inf
        %875 = vmax.xlane.f32.xlu0 %v874
        %v876 = vpop.xlane.xlu0 %875
        %v877 = vsel %vm867, %v724, -inf
        %878 = vmax.xlane.f32.xlu0 %v877
        %v879 = vpop.xlane.xlu0 %878
        %v880 = vsel %vm867, %v729, -inf
        %881 = vmax.xlane.f32.xlu0 %v880
        %v882 = vpop.xlane.xlu0 %881
        %v883 = vsel %vm867, %v734, -inf
        %884 = vmax.xlane.f32.xlu0 %v883
        %v885 = vpop.xlane.xlu0 %884
        %v886 = vsel %vm867, %v739, -inf
        %887 = vmax.xlane.f32.xlu0 %v886
        %v888 = vpop.xlane.xlu0 %887
        %v889 = vsel %vm867, %v744, -inf
        %890 = vmax.xlane.f32.xlu0 %v889
        %v891 = vpop.xlane.xlu0 %890
        %v892 = vsel %vm867, %v749, -inf
        %893 = vmax.xlane.f32.xlu0 %v892
        %v894 = vpop.xlane.xlu0 %893
        %v895 = vsel %vm867, %v754, -inf
        %896 = vmax.xlane.f32.xlu0 %v895
        %v897 = vpop.xlane.xlu0 %896
        %v898 = vsel %vm867, %v759, -inf
        %899 = vmax.xlane.f32.xlu0 %v898
        %v900 = vpop.xlane.xlu0 %899
        %v901 = vsel %vm867, %v764, -inf
        %902 = vmax.xlane.f32.xlu0 %v901
        %v903 = vpop.xlane.xlu0 %902
        %v904 = vsel %vm867, %v769, -inf
        %905 = vmax.xlane.f32.xlu0 %v904
        %v906 = vpop.xlane.xlu0 %905
        %v907 = vsel %vm867, %v774, -inf
        %908 = vmax.xlane.f32.xlu0 %v907
        %v909 = vpop.xlane.xlu0 %908
        %v910 = vsel %vm867, %v779, -inf
        %911 = vmax.xlane.f32.xlu0 %v910
        %v912 = vpop.xlane.xlu0 %911
        %v913 = vsel %vm867, %v784, -inf
        %914 = vmax.xlane.f32.xlu0 %v913
        %v915 = vpop.xlane.xlu0 %914
        %v916 = vsel %vm867, %v789, -inf
        %917 = vmax.xlane.f32.xlu0 %v916
        %v918 = vpop.xlane.xlu0 %917
        %v919 = vsel %vm867, %v794, -inf
        %920 = vmax.xlane.f32.xlu0 %v919
        %v921 = vpop.xlane.xlu0 %920
        %v922 = vsel %vm867, %v799, -inf
        %923 = vmax.xlane.f32.xlu0 %v922
        %v924 = vpop.xlane.xlu0 %923
        %v925 = vsel %vm867, %v804, -inf
        %926 = vmax.xlane.f32.xlu0 %v925
        %v927 = vpop.xlane.xlu0 %926
        %v928 = vsel %vm867, %v809, -inf
        %929 = vmax.xlane.f32.xlu0 %v928
        %v930 = vpop.xlane.xlu0 %929
        %v931 = vsel %vm867, %v814, -inf
        %932 = vmax.xlane.f32.xlu0 %v931
        %v933 = vpop.xlane.xlu0 %932
        %v934 = vsel %vm867, %v819, -inf
        %935 = vmax.xlane.f32.xlu0 %v934
        %v936 = vpop.xlane.xlu0 %935
        %v937 = vsel %vm867, %v824, -inf
        %938 = vmax.xlane.f32.xlu0 %v937
        %v939 = vpop.xlane.xlu0 %938
        %v940 = vsel %vm867, %v829, -inf
        %941 = vmax.xlane.f32.xlu0 %v940
        %v942 = vpop.xlane.xlu0 %941
        %v943 = vsel %vm867, %v834, -inf
        %944 = vmax.xlane.f32.xlu0 %v943
        %v945 = vpop.xlane.xlu0 %944
        %v946 = vsel %vm867, %v839, -inf
        %947 = vmax.xlane.f32.xlu0 %v946
        %v948 = vpop.xlane.xlu0 %947
        %v949 = vsel %vm867, %v844, -inf
        %950 = vmax.xlane.f32.xlu0 %v949
        %v951 = vpop.xlane.xlu0 %950
        %v952 = vsel %vm867, %v849, -inf
        %953 = vmax.xlane.f32.xlu0 %v952
        %v954 = vpop.xlane.xlu0 %953
        %v955 = vsel %vm867, %v854, -inf
        %956 = vmax.xlane.f32.xlu0 %v955
        %v957 = vpop.xlane.xlu0 %956
        %v958 = vsel %vm867, %v859, -inf
        %959 = vmax.xlane.f32.xlu0 %v958
        %v960 = vpop.xlane.xlu0 %959
        %v961 = vsel %vm867, %v864, -inf
        %962 = vmax.xlane.f32.xlu0 %v961
        %v963 = vpop.xlane.xlu0 %962
        %v964 = vsub.f32 %v709, %v870
        %v965 = vsub.f32 %v714, %v873
        %v966 = vsub.f32 %v719, %v876
        %v967 = vsub.f32 %v724, %v879
        %v968 = vsub.f32 %v729, %v882
        %v969 = vsub.f32 %v734, %v885
        %v970 = vsub.f32 %v739, %v888
        %v971 = vsub.f32 %v744, %v891
        %v972 = vsub.f32 %v749, %v894
        %v973 = vsub.f32 %v754, %v897
        %v974 = vsub.f32 %v759, %v900
        %v975 = vsub.f32 %v764, %v903
        %v976 = vsub.f32 %v769, %v906
        %v977 = vsub.f32 %v774, %v909
        %v978 = vsub.f32 %v779, %v912
        %v979 = vsub.f32 %v784, %v915
        %v980 = vsub.f32 %v789, %v918
        %v981 = vsub.f32 %v794, %v921
        %v982 = vsub.f32 %v799, %v924
        %v983 = vsub.f32 %v804, %v927
        %v984 = vsub.f32 %v809, %v930
        %v985 = vsub.f32 %v814, %v933
        %v986 = vsub.f32 %v819, %v936
        %v987 = vsub.f32 %v824, %v939
        %v988 = vsub.f32 %v829, %v942
        %v989 = vsub.f32 %v834, %v945
        %v990 = vsub.f32 %v839, %v948
        %v991 = vsub.f32 %v844, %v951
        %v992 = vsub.f32 %v849, %v954
        %v993 = vsub.f32 %v854, %v957
        %v994 = vsub.f32 %v859, %v960
        %v995 = vsub.f32 %v864, %v963
        %v996 = vmul.f32 %v964, 1.442695
        %v997 = vpow.pop %v996
        %v998 = vmul.f32 %v965, 1.442695
        %v999 = vpow.pop %v998
        %v1000 = vmul.f32 %v966, 1.442695
        %v1001 = vpow.pop %v1000
        %v1002 = vmul.f32 %v967, 1.442695
        %v1003 = vpow.pop %v1002
        %v1004 = vmul.f32 %v968, 1.442695
        %v1005 = vpow.pop %v1004
        %v1006 = vmul.f32 %v969, 1.442695
        %v1007 = vpow.pop %v1006
        %v1008 = vmul.f32 %v970, 1.442695
        %v1009 = vpow.pop %v1008
        %v1010 = vmul.f32 %v971, 1.442695
        %v1011 = vpow.pop %v1010
        %v1012 = vmul.f32 %v972, 1.442695
        %v1013 = vpow.pop %v1012
        %v1014 = vmul.f32 %v973, 1.442695
        %v1015 = vpow.pop %v1014
        %v1016 = vmul.f32 %v974, 1.442695
        %v1017 = vpow.pop %v1016
        %v1018 = vmul.f32 %v975, 1.442695
        %v1019 = vpow.pop %v1018
        %v1020 = vmul.f32 %v976, 1.442695
        %v1021 = vpow.pop %v1020
        %v1022 = vmul.f32 %v977, 1.442695
        %v1023 = vpow.pop %v1022
        %v1024 = vmul.f32 %v978, 1.442695
        %v1025 = vpow.pop %v1024
        %v1026 = vmul.f32 %v979, 1.442695
        %v1027 = vpow.pop %v1026
        %v1028 = vmul.f32 %v980, 1.442695
        %v1029 = vpow.pop %v1028
        %v1030 = vmul.f32 %v981, 1.442695
        %v1031 = vpow.pop %v1030
        %v1032 = vmul.f32 %v982, 1.442695
        %v1033 = vpow.pop %v1032
        %v1034 = vmul.f32 %v983, 1.442695
        %v1035 = vpow.pop %v1034
        %v1036 = vmul.f32 %v984, 1.442695
        %v1037 = vpow.pop %v1036
        %v1038 = vmul.f32 %v985, 1.442695
        %v1039 = vpow.pop %v1038
        %v1040 = vmul.f32 %v986, 1.442695
        %v1041 = vpow.pop %v1040
        %v1042 = vmul.f32 %v987, 1.442695
        %v1043 = vpow.pop %v1042
        %v1044 = vmul.f32 %v988, 1.442695
        %v1045 = vpow.pop %v1044
        %v1046 = vmul.f32 %v989, 1.442695
        %v1047 = vpow.pop %v1046
        %v1048 = vmul.f32 %v990, 1.442695
        %v1049 = vpow.pop %v1048
        %v1050 = vmul.f32 %v991, 1.442695
        %v1051 = vpow.pop %v1050
        %v1052 = vmul.f32 %v992, 1.442695
        %v1053 = vpow.pop %v1052
        %v1054 = vmul.f32 %v993, 1.442695
        %v1055 = vpow.pop %v1054
        %v1056 = vmul.f32 %v994, 1.442695
        %v1057 = vpow.pop %v1056
        %v1058 = vmul.f32 %v995, 1.442695
        %v1059 = vpow.pop %v1058
        %v1060 = vsel %vm867, %v997, 0.0
        %1061 = vadd.xlane.f32.xlu0 %v1060
        %v1062 = vpop.xlane.xlu0 %1061
        %v1063 = vsel %vm867, %v999, 0.0
        %1064 = vadd.xlane.f32.xlu0 %v1063
        %v1065 = vpop.xlane.xlu0 %1064
        %v1066 = vsel %vm867, %v1001, 0.0
        %1067 = vadd.xlane.f32.xlu0 %v1066
        %v1068 = vpop.xlane.xlu0 %1067
        %v1069 = vsel %vm867, %v1003, 0.0
        %1070 = vadd.xlane.f32.xlu0 %v1069
        %v1071 = vpop.xlane.xlu0 %1070
        %v1072 = vsel %vm867, %v1005, 0.0
        %1073 = vadd.xlane.f32.xlu0 %v1072
        %v1074 = vpop.xlane.xlu0 %1073
        %v1075 = vsel %vm867, %v1007, 0.0
        %1076 = vadd.xlane.f32.xlu0 %v1075
        %v1077 = vpop.xlane.xlu0 %1076
        %v1078 = vsel %vm867, %v1009, 0.0
        %1079 = vadd.xlane.f32.xlu0 %v1078
        %v1080 = vpop.xlane.xlu0 %1079
        %v1081 = vsel %vm867, %v1011, 0.0
        %1082 = vadd.xlane.f32.xlu0 %v1081
        %v1083 = vpop.xlane.xlu0 %1082
        %v1084 = vsel %vm867, %v1013, 0.0
        %1085 = vadd.xlane.f32.xlu0 %v1084
        %v1086 = vpop.xlane.xlu0 %1085
        %v1087 = vsel %vm867, %v1015, 0.0
        %1088 = vadd.xlane.f32.xlu0 %v1087
        %v1089 = vpop.xlane.xlu0 %1088
        %v1090 = vsel %vm867, %v1017, 0.0
        %1091 = vadd.xlane.f32.xlu0 %v1090
        %v1092 = vpop.xlane.xlu0 %1091
        %v1093 = vsel %vm867, %v1019, 0.0
        %1094 = vadd.xlane.f32.xlu0 %v1093
        %v1095 = vpop.xlane.xlu0 %1094
        %v1096 = vsel %vm867, %v1021, 0.0
        %1097 = vadd.xlane.f32.xlu0 %v1096
        %v1098 = vpop.xlane.xlu0 %1097
        %v1099 = vsel %vm867, %v1023, 0.0
        %1100 = vadd.xlane.f32.xlu0 %v1099
        %v1101 = vpop.xlane.xlu0 %1100
        %v1102 = vsel %vm867, %v1025, 0.0
        %1103 = vadd.xlane.f32.xlu0 %v1102
        %v1104 = vpop.xlane.xlu0 %1103
        %v1105 = vsel %vm867, %v1027, 0.0
        %1106 = vadd.xlane.f32.xlu0 %v1105
        %v1107 = vpop.xlane.xlu0 %1106
        %v1108 = vsel %vm867, %v1029, 0.0
        %1109 = vadd.xlane.f32.xlu0 %v1108
        %v1110 = vpop.xlane.xlu0 %1109
        %v1111 = vsel %vm867, %v1031, 0.0
        %1112 = vadd.xlane.f32.xlu0 %v1111
        %v1113 = vpop.xlane.xlu0 %1112
        %v1114 = vsel %vm867, %v1033, 0.0
        %1115 = vadd.xlane.f32.xlu0 %v1114
        %v1116 = vpop.xlane.xlu0 %1115
        %v1117 = vsel %vm867, %v1035, 0.0
        %1118 = vadd.xlane.f32.xlu0 %v1117
        %v1119 = vpop.xlane.xlu0 %1118
        %v1120 = vsel %vm867, %v1037, 0.0
        %1121 = vadd.xlane.f32.xlu0 %v1120
        %v1122 = vpop.xlane.xlu0 %1121
        %v1123 = vsel %vm867, %v1039, 0.0
        %1124 = vadd.xlane.f32.xlu0 %v1123
        %v1125 = vpop.xlane.xlu0 %1124
        %v1126 = vsel %vm867, %v1041, 0.0
        %1127 = vadd.xlane.f32.xlu0 %v1126
        %v1128 = vpop.xlane.xlu0 %1127
        %v1129 = vsel %vm867, %v1043, 0.0
        %1130 = vadd.xlane.f32.xlu0 %v1129
        %v1131 = vpop.xlane.xlu0 %1130
        %v1132 = vsel %vm867, %v1045, 0.0
        %1133 = vadd.xlane.f32.xlu0 %v1132
        %v1134 = vpop.xlane.xlu0 %1133
        %v1135 = vsel %vm867, %v1047, 0.0
        %1136 = vadd.xlane.f32.xlu0 %v1135
        %v1137 = vpop.xlane.xlu0 %1136
        %v1138 = vsel %vm867, %v1049, 0.0
        %1139 = vadd.xlane.f32.xlu0 %v1138
        %v1140 = vpop.xlane.xlu0 %1139
        %v1141 = vsel %vm867, %v1051, 0.0
        %1142 = vadd.xlane.f32.xlu0 %v1141
        %v1143 = vpop.xlane.xlu0 %1142
        %v1144 = vsel %vm867, %v1053, 0.0
        %1145 = vadd.xlane.f32.xlu0 %v1144
        %v1146 = vpop.xlane.xlu0 %1145
        %v1147 = vsel %vm867, %v1055, 0.0
        %1148 = vadd.xlane.f32.xlu0 %v1147
        %v1149 = vpop.xlane.xlu0 %1148
        %v1150 = vsel %vm867, %v1057, 0.0
        %1151 = vadd.xlane.f32.xlu0 %v1150
        %v1152 = vpop.xlane.xlu0 %1151
        %v1153 = vsel %vm867, %v1059, 0.0
        %1154 = vadd.xlane.f32.xlu0 %v1153
        %v1155 = vpop.xlane.xlu0 %1154
        %v1156 = vld [vmem:[%s343] sm:$0xff]
        %v1157 = vld [vmem:[%s343 + $0x8] sm:$0xff]
        %v1159 = vsel %vm867, %v997, 0
        %v1162 = vsel %vm867, %v999, 0
        %v1165 = vsel %vm867, %v1001, 0
        %v1168 = vsel %vm867, %v1003, 0
        %v1171 = vsel %vm867, %v1005, 0
        %v1174 = vsel %vm867, %v1007, 0
        %v1177 = vsel %vm867, %v1009, 0
        %v1180 = vsel %vm867, %v1011, 0
        %v1183 = vsel %vm867, %v1013, 0
        %v1186 = vsel %vm867, %v1015, 0
        %v1189 = vsel %vm867, %v1017, 0
        %v1192 = vsel %vm867, %v1019, 0
        %v1195 = vsel %vm867, %v1021, 0
        %v1198 = vsel %vm867, %v1023, 0
        %v1201 = vsel %vm867, %v1025, 0
        %v1204 = vsel %vm867, %v1027, 0
        %v1207 = vsel %vm867, %v1029, 0
        %v1210 = vsel %vm867, %v1031, 0
        %v1213 = vsel %vm867, %v1033, 0
        %v1216 = vsel %vm867, %v1035, 0
        %v1219 = vsel %vm867, %v1037, 0
        %v1222 = vsel %vm867, %v1039, 0
        %v1225 = vsel %vm867, %v1041, 0
        %v1228 = vsel %vm867, %v1043, 0
        %v1231 = vsel %vm867, %v1045, 0
        %v1234 = vsel %vm867, %v1047, 0
        %v1237 = vsel %vm867, %v1049, 0
        %v1240 = vsel %vm867, %v1051, 0
        %v1243 = vsel %vm867, %v1053, 0
        %v1246 = vsel %vm867, %v1055, 0
        %v1249 = vsel %vm867, %v1057, 0
        %v1252 = vsel %vm867, %v1059, 0
        %v1255 = vsel %vm867, %v1156, 0
        %v1258 = vsel %vm867, %v1157, 0
        %1260 = vmatprep.subr.mxu0 0.0
        %1261 = vmatpush1.xpose.msra.mxu0 %v1255
        %1262 = vmatprep.subr.mxu0 0.0
        %1263 = vmatpush1.xpose.msra.mxu0 %v1258
        %1264 = vmatprep.subr.mxu0 0.0
        %1265 = vmatpush1.xpose.msra.mxu0 0.0
        %1266 = vmatprep.subr.mxu0 0.0
        %1267 = vmatpush1.xpose.msra.mxu0 0.0
        %1268 = vmatprep.subr.mxu0 0.0
        %1269 = vmatpush1.xpose.msra.mxu0 0.0
        %1270 = vmatprep.subr.mxu0 0.0
        %1271 = vmatpush1.xpose.msra.mxu0 0.0
        %1272 = vmatprep.subr.mxu0 0.0
        %1273 = vmatpush1.xpose.msra.mxu0 0.0
        %1274 = vmatprep.subr.mxu0 0.0
        %1275 = vmatpush1.xpose.msra.mxu0 0.0
        %1276 = vmatprep.subr.mxu0 0.0
        %1277 = vmatpush1.xpose.msra.mxu0 0.0
        %1278 = vmatprep.subr.mxu0 0.0
        %1279 = vmatpush1.xpose.msra.mxu0 0.0
        %1280 = vmatprep.subr.mxu0 0.0
        %1281 = vmatpush1.xpose.msra.mxu0 0.0
        %1282 = vmatprep.subr.mxu0 0.0
        %1283 = vmatpush1.xpose.msra.mxu0 0.0
        %1284 = vmatprep.subr.mxu0 0.0
        %1285 = vmatpush1.xpose.msra.mxu0 0.0
        %1286 = vmatprep.subr.mxu0 0.0
        %1287 = vmatpush1.xpose.msra.mxu0 0.0
        %1288 = vmatprep.subr.mxu0 0.0
        %1289 = vmatpush1.xpose.msra.mxu0 0.0
        %1290 = vmatprep.subr.mxu0 0.0
        %1291 = vmatpush1.xpose.msra.mxu0 0.0
        %1292 = vmatprep.subr.mxu0 0.0
        %1293 = vmatpush1.xpose.msra.mxu0 0.0
        %1294 = vmatprep.subr.mxu0 0.0
        %1295 = vmatpush1.xpose.msra.mxu0 0.0
        %1296 = vmatprep.subr.mxu0 0.0
        %1297 = vmatpush1.xpose.msra.mxu0 0.0
        %1298 = vmatprep.subr.mxu0 0.0
        %1299 = vmatpush1.xpose.msra.mxu0 0.0
        %1300 = vmatprep.subr.mxu0 0.0
        %1301 = vmatpush1.xpose.msra.mxu0 0.0
        %1302 = vmatprep.subr.mxu0 0.0
        %1303 = vmatpush1.xpose.msra.mxu0 0.0
        %1304 = vmatprep.subr.mxu0 0.0
        %1305 = vmatpush1.xpose.msra.mxu0 0.0
        %1306 = vmatprep.subr.mxu0 0.0
        %1307 = vmatpush1.xpose.msra.mxu0 0.0
        %1308 = vmatprep.subr.mxu0 0.0
        %1309 = vmatpush1.xpose.msra.mxu0 0.0
        %1310 = vmatprep.subr.mxu0 0.0
        %1311 = vmatpush1.xpose.msra.mxu0 0.0
        %1312 = vmatprep.subr.mxu0 0.0
        %1313 = vmatpush1.xpose.msra.mxu0 0.0
        %1314 = vmatprep.subr.mxu0 0.0
        %1315 = vmatpush1.xpose.msra.mxu0 0.0
        %1316 = vmatprep.subr.mxu0 0.0
        %1317 = vmatpush1.xpose.msra.mxu0 0.0
        %1318 = vmatprep.subr.mxu0 0.0
        %1319 = vmatpush1.xpose.msra.mxu0 0.0
        %1320 = vmatprep.subr.mxu0 0.0
        %1321 = vmatpush1.xpose.msra.mxu0 0.0
        %1322 = vmatprep.subr.mxu0 0.0
        %1323 = vmatpush1.xpose.msra.mxu0 0.0
        %1324 = vmatprep.mubr.f32.mxu0 0.0
        %1325 = vmatmul.mubr.f32.gmra.mrb[0].mxu0 %v1159
        %v1326 = vpop.f32.mrb[0].mxu0
        %v1327 = vadd.f32 0.0, %v1326
        %v1328 = vpop.f32.mrb[0].mxu0
        %1329 = vmatprep.mubr.f32.mxu0 0.0
        %1330 = vmatmul.mubr.f32.gmra.mrb[0].mxu0 %v1162
        %v1331 = vpop.f32.mrb[0].mxu0
        %v1332 = vadd.f32 0.0, %v1331
        %v1333 = vpop.f32.mrb[0].mxu0
        %1334 = vmatprep.mubr.f32.mxu0 0.0
        %1335 = vmatmul.mubr.f32.gmra.mrb[0].mxu0 %v1165
        %v1336 = vpop.f32.mrb[0].mxu0
        %v1337 = vadd.f32 0.0, %v1336
        %v1338 = vpop.f32.mrb[0].mxu0
        %1339 = vmatprep.mubr.f32.mxu0 0.0
        %1340 = vmatmul.mubr.f32.gmra.mrb[0].mxu0 %v1168
        %v1341 = vpop.f32.mrb[0].mxu0
        %v1342 = vadd.f32 0.0, %v1341
        %v1343 = vpop.f32.mrb[0].mxu0
        %1344 = vmatprep.mubr.f32.mxu0 0.0
        %1345 = vmatmul.mubr.f32.gmra.mrb[0].mxu0 %v1171
        %v1346 = vpop.f32.mrb[0].mxu0
        %v1347 = vadd.f32 0.0, %v1346
        %v1348 = vpop.f32.mrb[0].mxu0
        %1349 = vmatprep.mubr.f32.mxu0 0.0
        %1350 = vmatmul.mubr.f32.gmra.mrb[0].mxu0 %v1174
        %v1351 = vpop.f32.mrb[0].mxu0
        %v1352 = vadd.f32 0.0, %v1351
        %v1353 = vpop.f32.mrb[0].mxu0
        %1354 = vmatprep.mubr.f32.mxu0 0.0
        %1355 = vmatmul.mubr.f32.gmra.mrb[0].mxu0 %v1177
        %v1356 = vpop.f32.mrb[0].mxu0
        %v1357 = vadd.f32 0.0, %v1356
        %v1358 = vpop.f32.mrb[0].mxu0
        %1359 = vmatprep.mubr.f32.mxu0 0.0
        %1360 = vmatmul.mubr.f32.gmra.mrb[0].mxu0 %v1180
        %v1361 = vpop.f32.mrb[0].mxu0
        %v1362 = vadd.f32 0.0, %v1361
        %v1363 = vpop.f32.mrb[0].mxu0
        %1364 = vmatprep.mubr.f32.mxu0 0.0
        %1365 = vmatmul.mubr.f32.gmra.mrb[0].mxu0 %v1183
        %v1366 = vpop.f32.mrb[0].mxu0
        %v1367 = vadd.f32 0.0, %v1366
        %v1368 = vpop.f32.mrb[0].mxu0
        %1369 = vmatprep.mubr.f32.mxu0 0.0
        %1370 = vmatmul.mubr.f32.gmra.mrb[0].mxu0 %v1186
        %v1371 = vpop.f32.mrb[0].mxu0
        %v1372 = vadd.f32 0.0, %v1371
        %v1373 = vpop.f32.mrb[0].mxu0
        %1374 = vmatprep.mubr.f32.mxu0 0.0
        %1375 = vmatmul.mubr.f32.gmra.mrb[0].mxu0 %v1189
        %v1376 = vpop.f32.mrb[0].mxu0
        %v1377 = vadd.f32 0.0, %v1376
        %v1378 = vpop.f32.mrb[0].mxu0
        %1379 = vmatprep.mubr.f32.mxu0 0.0
        %1380 = vmatmul.mubr.f32.gmra.mrb[0].mxu0 %v1192
        %v1381 = vpop.f32.mrb[0].mxu0
        %v1382 = vadd.f32 0.0, %v1381
        %v1383 = vpop.f32.mrb[0].mxu0
        %1384 = vmatprep.mubr.f32.mxu0 0.0
        %1385 = vmatmul.mubr.f32.gmra.mrb[0].mxu0 %v1195
        %v1386 = vpop.f32.mrb[0].mxu0
        %v1387 = vadd.f32 0.0, %v1386
        %v1388 = vpop.f32.mrb[0].mxu0
        %1389 = vmatprep.mubr.f32.mxu0 0.0
        %1390 = vmatmul.mubr.f32.gmra.mrb[0].mxu0 %v1198
        %v1391 = vpop.f32.mrb[0].mxu0
        %v1392 = vadd.f32 0.0, %v1391
        %v1393 = vpop.f32.mrb[0].mxu0
        %1394 = vmatprep.mubr.f32.mxu0 0.0
        %1395 = vmatmul.mubr.f32.gmra.mrb[0].mxu0 %v1201
        %v1396 = vpop.f32.mrb[0].mxu0
        %v1397 = vadd.f32 0.0, %v1396
        %v1398 = vpop.f32.mrb[0].mxu0
        %1399 = vmatprep.mubr.f32.mxu0 0.0
        %1400 = vmatmul.mubr.f32.gmra.mrb[0].mxu0 %v1204
        %v1401 = vpop.f32.mrb[0].mxu0
        %v1402 = vadd.f32 0.0, %v1401
        %v1403 = vpop.f32.mrb[0].mxu0
        %1404 = vmatprep.mubr.f32.mxu0 0.0
        %1405 = vmatmul.mubr.f32.gmra.mrb[0].mxu0 %v1207
        %v1406 = vpop.f32.mrb[0].mxu0
        %v1407 = vadd.f32 0.0, %v1406
        %v1408 = vpop.f32.mrb[0].mxu0
        %1409 = vmatprep.mubr.f32.mxu0 0.0
        %1410 = vmatmul.mubr.f32.gmra.mrb[0].mxu0 %v1210
        %v1411 = vpop.f32.mrb[0].mxu0
        %v1412 = vadd.f32 0.0, %v1411
        %v1413 = vpop.f32.mrb[0].mxu0
        %1414 = vmatprep.mubr.f32.mxu0 0.0
        %1415 = vmatmul.mubr.f32.gmra.mrb[0].mxu0 %v1213
        %v1416 = vpop.f32.mrb[0].mxu0
        %v1417 = vadd.f32 0.0, %v1416
        %v1418 = vpop.f32.mrb[0].mxu0
        %1419 = vmatprep.mubr.f32.mxu0 0.0
        %1420 = vmatmul.mubr.f32.gmra.mrb[0].mxu0 %v1216
        %v1421 = vpop.f32.mrb[0].mxu0
        %v1422 = vadd.f32 0.0, %v1421
        %v1423 = vpop.f32.mrb[0].mxu0
        %1424 = vmatprep.mubr.f32.mxu0 0.0
        %1425 = vmatmul.mubr.f32.gmra.mrb[0].mxu0 %v1219
        %v1426 = vpop.f32.mrb[0].mxu0
        %v1427 = vadd.f32 0.0, %v1426
        %v1428 = vpop.f32.mrb[0].mxu0
        %1429 = vmatprep.mubr.f32.mxu0 0.0
        %1430 = vmatmul.mubr.f32.gmra.mrb[0].mxu0 %v1222
        %v1431 = vpop.f32.mrb[0].mxu0
        %v1432 = vadd.f32 0.0, %v1431
        %v1433 = vpop.f32.mrb[0].mxu0
        %1434 = vmatprep.mubr.f32.mxu0 0.0
        %1435 = vmatmul.mubr.f32.gmra.mrb[0].mxu0 %v1225
        %v1436 = vpop.f32.mrb[0].mxu0
        %v1437 = vadd.f32 0.0, %v1436
        %v1438 = vpop.f32.mrb[0].mxu0
        %1439 = vmatprep.mubr.f32.mxu0 0.0
        %1440 = vmatmul.mubr.f32.gmra.mrb[0].mxu0 %v1228
        %v1441 = vpop.f32.mrb[0].mxu0
        %v1442 = vadd.f32 0.0, %v1441
        %v1443 = vpop.f32.mrb[0].mxu0
        %1444 = vmatprep.mubr.f32.mxu0 0.0
        %1445 = vmatmul.mubr.f32.gmra.mrb[0].mxu0 %v1231
        %v1446 = vpop.f32.mrb[0].mxu0
        %v1447 = vadd.f32 0.0, %v1446
        %v1448 = vpop.f32.mrb[0].mxu0
        %1449 = vmatprep.mubr.f32.mxu0 0.0
        %1450 = vmatmul.mubr.f32.gmra.mrb[0].mxu0 %v1234
        %v1451 = vpop.f32.mrb[0].mxu0
        %v1452 = vadd.f32 0.0, %v1451
        %v1453 = vpop.f32.mrb[0].mxu0
        %1454 = vmatprep.mubr.f32.mxu0 0.0
        %1455 = vmatmul.mubr.f32.gmra.mrb[0].mxu0 %v1237
        %v1456 = vpop.f32.mrb[0].mxu0
        %v1457 = vadd.f32 0.0, %v1456
        %v1458 = vpop.f32.mrb[0].mxu0
        %1459 = vmatprep.mubr.f32.mxu0 0.0
        %1460 = vmatmul.mubr.f32.gmra.mrb[0].mxu0 %v1240
        %v1461 = vpop.f32.mrb[0].mxu0
        %v1462 = vadd.f32 0.0, %v1461
        %v1463 = vpop.f32.mrb[0].mxu0
        %1464 = vmatprep.mubr.f32.mxu0 0.0
        %1465 = vmatmul.mubr.f32.gmra.mrb[0].mxu0 %v1243
        %v1466 = vpop.f32.mrb[0].mxu0
        %v1467 = vadd.f32 0.0, %v1466
        %v1468 = vpop.f32.mrb[0].mxu0
        %1469 = vmatprep.mubr.f32.mxu0 0.0
        %1470 = vmatmul.mubr.f32.gmra.mrb[0].mxu0 %v1246
        %v1471 = vpop.f32.mrb[0].mxu0
        %v1472 = vadd.f32 0.0, %v1471
        %v1473 = vpop.f32.mrb[0].mxu0
        %1474 = vmatprep.mubr.f32.mxu0 0.0
        %1475 = vmatmul.mubr.f32.gmra.mrb[0].mxu0 %v1249
        %v1476 = vpop.f32.mrb[0].mxu0
        %v1477 = vadd.f32 0.0, %v1476
        %v1478 = vpop.f32.mrb[0].mxu0
        %1479 = vmatprep.mubr.f32.mxu0 0.0
        %1480 = vmatmul.mubr.f32.gmra.mrb[0].mxu0 %v1252
        %v1481 = vpop.f32.mrb[0].mxu0
        %v1482 = vadd.f32 0.0, %v1481
        %v1483 = vpop.f32.mrb[0].mxu0
        %1484 = vdwg.mxu0
        %v1485 = vrcp.pop %v1062
        %v1486 = vrcp.pop %v1065
        %v1487 = vrcp.pop %v1068
        %v1488 = vrcp.pop %v1071
        %v1489 = vrcp.pop %v1074
        %v1490 = vrcp.pop %v1077
        %v1491 = vrcp.pop %v1080
        %v1492 = vrcp.pop %v1083
        %v1493 = vrcp.pop %v1086
        %v1494 = vrcp.pop %v1089
        %v1495 = vrcp.pop %v1092
        %v1496 = vrcp.pop %v1095
        %v1497 = vrcp.pop %v1098
        %v1498 = vrcp.pop %v1101
        %v1499 = vrcp.pop %v1104
        %v1500 = vrcp.pop %v1107
        %v1501 = vrcp.pop %v1110
        %v1502 = vrcp.pop %v1113
        %v1503 = vrcp.pop %v1116
        %v1504 = vrcp.pop %v1119
        %v1505 = vrcp.pop %v1122
        %v1506 = vrcp.pop %v1125
        %v1507 = vrcp.pop %v1128
        %v1508 = vrcp.pop %v1131
        %v1509 = vrcp.pop %v1134
        %v1510 = vrcp.pop %v1137
        %v1511 = vrcp.pop %v1140
        %v1512 = vrcp.pop %v1143
        %v1513 = vrcp.pop %v1146
        %v1514 = vrcp.pop %v1149
        %v1515 = vrcp.pop %v1152
        %v1516 = vrcp.pop %v1155
        %v1517 = vmul.f32 %v1327, %v1485
        %v1518 = vmul.f32 %v1332, %v1486
        %v1519 = vmul.f32 %v1337, %v1487
        %v1520 = vmul.f32 %v1342, %v1488
        %v1521 = vmul.f32 %v1347, %v1489
        %v1522 = vmul.f32 %v1352, %v1490
        %v1523 = vmul.f32 %v1357, %v1491
        %v1524 = vmul.f32 %v1362, %v1492
        %v1525 = vmul.f32 %v1367, %v1493
        %v1526 = vmul.f32 %v1372, %v1494
        %v1527 = vmul.f32 %v1377, %v1495
        %v1528 = vmul.f32 %v1382, %v1496
        %v1529 = vmul.f32 %v1387, %v1497
        %v1530 = vmul.f32 %v1392, %v1498
        %v1531 = vmul.f32 %v1397, %v1499
        %v1532 = vmul.f32 %v1402, %v1500
        %v1533 = vmul.f32 %v1407, %v1501
        %v1534 = vmul.f32 %v1412, %v1502
        %v1535 = vmul.f32 %v1417, %v1503
        %v1536 = vmul.f32 %v1422, %v1504
        %v1537 = vmul.f32 %v1427, %v1505
        %v1538 = vmul.f32 %v1432, %v1506
        %v1539 = vmul.f32 %v1437, %v1507
        %v1540 = vmul.f32 %v1442, %v1508
        %v1541 = vmul.f32 %v1447, %v1509
        %v1542 = vmul.f32 %v1452, %v1510
        %v1543 = vmul.f32 %v1457, %v1511
        %v1544 = vmul.f32 %v1462, %v1512
        %v1545 = vmul.f32 %v1467, %v1513
        %v1546 = vmul.f32 %v1472, %v1514
        %v1547 = vmul.f32 %v1477, %v1515
        %v1548 = vmul.f32 %v1482, %v1516
        %v1549 = vld [vmem:[#allocation11] sm:$0xff]
        %v1550 = vld [vmem:[#allocation11 + $0x8] sm:$0xff]
        %v1551 = vld [vmem:[#allocation11 + $0x10] sm:$0xff]
        %v1552 = vld [vmem:[#allocation11 + $0x18] sm:$0xff]
        %vm1553 = vcmask 130048
        %v1555 = vsel %vm1553, %v1549, 0
        %v1558 = vsel %vm1553, %v1550, 0
        %v1561 = vsel %vm1553, %v1551, 0
        %v1564 = vsel %vm1553, %v1552, 0
        %v1567 = vsel %vm1553, %v1517, 0
        %v1570 = vsel %vm1553, %v1518, 0
        %v1573 = vsel %vm1553, %v1519, 0
        %v1576 = vsel %vm1553, %v1520, 0
        %v1579 = vsel %vm1553, %v1521, 0
        %v1582 = vsel %vm1553, %v1522, 0
        %v1585 = vsel %vm1553, %v1523, 0
        %v1588 = vsel %vm1553, %v1524, 0
        %v1591 = vsel %vm1553, %v1525, 0
        %v1594 = vsel %vm1553, %v1526, 0
        %v1597 = vsel %vm1553, %v1527, 0
        %v1600 = vsel %vm1553, %v1528, 0
        %v1603 = vsel %vm1553, %v1529, 0
        %v1606 = vsel %vm1553, %v1530, 0
        %v1609 = vsel %vm1553, %v1531, 0
        %v1612 = vsel %vm1553, %v1532, 0
        %v1615 = vsel %vm1553, %v1533, 0
        %v1618 = vsel %vm1553, %v1534, 0
        %v1621 = vsel %vm1553, %v1535, 0
        %v1624 = vsel %vm1553, %v1536, 0
        %v1627 = vsel %vm1553, %v1537, 0
        %v1630 = vsel %vm1553, %v1538, 0
        %v1633 = vsel %vm1553, %v1539, 0
        %v1636 = vsel %vm1553, %v1540, 0
        %v1639 = vsel %vm1553, %v1541, 0
        %v1642 = vsel %vm1553, %v1542, 0
        %v1645 = vsel %vm1553, %v1543, 0
        %v1648 = vsel %vm1553, %v1544, 0
        %v1651 = vsel %vm1553, %v1545, 0
        %v1654 = vsel %vm1553, %v1546, 0
        %v1657 = vsel %vm1553, %v1547, 0
        %v1660 = vsel %vm1553, %v1548, 0
        %1662 = vmatprep.subr.mxu0 0.0
        %1663 = vmatpush1.xpose.msra.mxu0 %v1567
        %1664 = vmatprep.subr.mxu0 0.0
        %1665 = vmatpush1.xpose.msra.mxu0 %v1570
        %1666 = vmatprep.subr.mxu0 0.0
        %1667 = vmatpush1.xpose.msra.mxu0 %v1573
        %1668 = vmatprep.subr.mxu0 0.0
        %1669 = vmatpush1.xpose.msra.mxu0 %v1576
        %1670 = vmatprep.subr.mxu0 0.0
        %1671 = vmatpush1.xpose.msra.mxu0 %v1579
        %1672 = vmatprep.subr.mxu0 0.0
        %1673 = vmatpush1.xpose.msra.mxu0 %v1582
        %1674 = vmatprep.subr.mxu0 0.0
        %1675 = vmatpush1.xpose.msra.mxu0 %v1585
        %1676 = vmatprep.subr.mxu0 0.0
        %1677 = vmatpush1.xpose.msra.mxu0 %v1588
        %1678 = vmatprep.subr.mxu0 0.0
        %1679 = vmatpush1.xpose.msra.mxu0 %v1591
        %1680 = vmatprep.subr.mxu0 0.0
        %1681 = vmatpush1.xpose.msra.mxu0 %v1594
        %1682 = vmatprep.subr.mxu0 0.0
        %1683 = vmatpush1.xpose.msra.mxu0 %v1597
        %1684 = vmatprep.subr.mxu0 0.0
        %1685 = vmatpush1.xpose.msra.mxu0 %v1600
        %1686 = vmatprep.subr.mxu0 0.0
        %1687 = vmatpush1.xpose.msra.mxu0 %v1603
        %1688 = vmatprep.subr.mxu0 0.0
        %1689 = vmatpush1.xpose.msra.mxu0 %v1606
        %1690 = vmatprep.subr.mxu0 0.0
        %1691 = vmatpush1.xpose.msra.mxu0 %v1609
        %1692 = vmatprep.subr.mxu0 0.0
        %1693 = vmatpush1.xpose.msra.mxu0 %v1612
        %1694 = vmatprep.subr.mxu0 0.0
        %1695 = vmatpush1.xpose.msra.mxu0 %v1615
        %1696 = vmatprep.subr.mxu0 0.0
        %1697 = vmatpush1.xpose.msra.mxu0 %v1618
        %1698 = vmatprep.subr.mxu0 0.0
        %1699 = vmatpush1.xpose.msra.mxu0 %v1621
        %1700 = vmatprep.subr.mxu0 0.0
        %1701 = vmatpush1.xpose.msra.mxu0 %v1624
        %1702 = vmatprep.subr.mxu0 0.0
        %1703 = vmatpush1.xpose.msra.mxu0 %v1627
        %1704 = vmatprep.subr.mxu0 0.0
        %1705 = vmatpush1.xpose.msra.mxu0 %v1630
        %1706 = vmatprep.subr.mxu0 0.0
        %1707 = vmatpush1.xpose.msra.mxu0 %v1633
        %1708 = vmatprep.subr.mxu0 0.0
        %1709 = vmatpush1.xpose.msra.mxu0 %v1636
        %1710 = vmatprep.subr.mxu0 0.0
        %1711 = vmatpush1.xpose.msra.mxu0 %v1639
        %1712 = vmatprep.subr.mxu0 0.0
        %1713 = vmatpush1.xpose.msra.mxu0 %v1642
        %1714 = vmatprep.subr.mxu0 0.0
        %1715 = vmatpush1.xpose.msra.mxu0 %v1645
        %1716 = vmatprep.subr.mxu0 0.0
        %1717 = vmatpush1.xpose.msra.mxu0 %v1648
        %1718 = vmatprep.subr.mxu0 0.0
        %1719 = vmatpush1.xpose.msra.mxu0 %v1651
        %1720 = vmatprep.subr.mxu0 0.0
        %1721 = vmatpush1.xpose.msra.mxu0 %v1654
        %1722 = vmatprep.subr.mxu0 0.0
        %1723 = vmatpush1.xpose.msra.mxu0 %v1657
        %1724 = vmatprep.subr.mxu0 0.0
        %1725 = vmatpush1.xpose.msra.mxu0 %v1660
        %1726 = vmatprep.mubr.f32.mxu0 0.0
        %1727 = vmatmul.mubr.f32.gmra.mrb[0].mxu0 %v1555
        %v1728 = vpop.f32.mrb[0].mxu0
        %v1729 = vadd.f32 0.0, %v1728
        %v1730 = vpop.f32.mrb[0].mxu0
        %v1731 = vadd.f32 0.0, %v1730
        %1732 = vmatprep.mubr.f32.mxu0 0.0
        %1733 = vmatmul.mubr.f32.gmra.mrb[0].mxu0 %v1558
        %v1734 = vpop.f32.mrb[0].mxu0
        %v1735 = vadd.f32 0.0, %v1734
        %v1736 = vpop.f32.mrb[0].mxu0
        %v1737 = vadd.f32 0.0, %v1736
        %1738 = vmatprep.mubr.f32.mxu0 0.0
        %1739 = vmatmul.mubr.f32.gmra.mrb[0].mxu0 %v1561
        %v1740 = vpop.f32.mrb[0].mxu0
        %v1741 = vadd.f32 0.0, %v1740
        %v1742 = vpop.f32.mrb[0].mxu0
        %v1743 = vadd.f32 0.0, %v1742
        %1744 = vmatprep.mubr.f32.mxu0 0.0
        %1745 = vmatmul.mubr.f32.gmra.mrb[0].mxu0 %v1564
        %v1746 = vpop.f32.mrb[0].mxu0
        %v1747 = vadd.f32 0.0, %v1746
        %v1748 = vpop.f32.mrb[0].mxu0
        %v1749 = vadd.f32 0.0, %v1748
        %1750 = vdwg.mxu0
        %s1751 = sld [smem:[#allocation2]]
        %v1752 = vstv %s1751
        %v1753 = vmul.f32 %v1752, %v1729
        %v1754 = vmul.f32 %v1752, %v1731
        %v1755 = vmul.f32 %v1752, %v1735
        %v1756 = vmul.f32 %v1752, %v1737
        %v1757 = vmul.f32 %v1752, %v1741
        %v1758 = vmul.f32 %v1752, %v1743
        %v1759 = vmul.f32 %v1752, %v1747
        %v1760 = vmul.f32 %v1752, %v1749
        %v1761 = vadd.f32 %v392, %v1753
        %v1762 = vadd.f32 %v393, %v1754
        %v1763 = vadd.f32 %v394, %v1755
        %v1764 = vadd.f32 %v395, %v1756
        %v1765 = vadd.f32 %v396, %v1757
        %v1766 = vadd.f32 %v397, %v1758
        %v1767 = vadd.f32 %v398, %v1759
        %v1768 = vadd.f32 %v399, %v1760
        %1769 = vst [vmem:[%s389] sm:$0xff] %v1761
        %1770 = vst [vmem:[%s389 + $0x8] sm:$0xff] %v1762
        %1771 = vst [vmem:[%s389 + $0x10] sm:$0xff] %v1763
        %1772 = vst [vmem:[%s389 + $0x18] sm:$0xff] %v1764
        %1773 = vst [vmem:[%s389 + $0x20] sm:$0xff] %v1765
        %1774 = vst [vmem:[%s389 + $0x28] sm:$0xff] %v1766
        %1775 = vst [vmem:[%s389 + $0x30] sm:$0xff] %v1767
        %1776 = vst [vmem:[%s389 + $0x38] sm:$0xff] %v1768
        %s1777 = sand.u32 %s193, 1
        %s1778 = scalar_lea.sflag [#allocation5], %s1777
        %s1779 = sand.u32 %s193, 1
        %s1780 = smul.addr %s1779, 64
        %s1781 = scalar_lea.vmem [#allocation12], %s1780
        // Predicated region
        $region65: #{self_attention.3} parent=43 // pred_check
          %p1782 = pneg %p203
        $region66: #{self_attention.3} parent=43 // pred_check_branch
          %1784 = sbr.rel (%p1782) target = $region68
        $region67: #{self_attention.3} parent=43 // pred_region
          %s1785 = smul.u32 2, %s33
          %s1787 = ssub.s32 1024, 1024
          %1788 = vsyncadd %s1778, %s1787
          %s1789 = smul.addr %s32, 8
          %s1790 = sadd.s32 %s1785, %s1789
          %s1791 = smul.addr %s1790, 128
          %s1792 = scalar_lea.hbm %s6, %s1791
          %s1793 = sshll.u32 %s1781, 4
          %s1794 = int_to_ptr.vmem [resolvable:$true] %s1793
          %1799 = dma.vmem_to_hbm [thread:$0]  %s1794, 1024, %s1792, %s1778, 256, 256, 16
        $region68: #{self_attention.3} parent=43 // pred_fallthru
          _
      $region44: #{self_attention.3} parent=5 // pred_fallthru
        _
      %p1800 = scmp.le.s32.totalorder 2, %s23
      // Predicated region
      $region69: #{self_attention.3} parent=5 // pred_check
        %p1801 = pneg %p1800
      $region70: #{self_attention.3} parent=5 // pred_check_branch
        %1803 = sbr.rel (%p1801) target = $region72
      $region71: #{self_attention.3} parent=5 // pred_region
        %s1804 = ssub.s32 %s23, 2
        // Predicated region
        $region73: #{self_attention.3} parent=71 // pred_check
          %p1805 = pneg %p209
        $region74: #{self_attention.3} parent=71 // pred_check_branch
          %1807 = sbr.rel (%p1805) target = $region76
        $region75: #{self_attention.3} parent=71 // pred_region
          %s1808 = sand.u32 %s194, 1
          %s1809 = scalar_lea.sflag [#allocation5], %s1808
          %s1810 = sand.u32 %s194, 1
          %s1811 = smul.addr %s1810, 64
          %s1812 = scalar_lea.vmem [#allocation12], %s1811
          %1813 = dma.done %s1809, 1024
        $region76: #{self_attention.3} parent=71 // pred_fallthru
          _
      $region72: #{self_attention.3} parent=5 // pred_fallthru
        _
    $region6: #{self_attention.3} parent=1 // loop_footer
      %s27 = sadd.s32 1, %s23
    $region7: #{self_attention.3} parent=1 // loop_footer_branch
      %22 = sbr.rel target = $region3
    $region8: #{self_attention.3} parent=1 // loop_exit
      _
    %1814 = vsyncpa [#allocation4], 1
    %s1815 = scalar_lea.sflag [#allocation4], 1
    %1816 = vsyncpa %s1815, 1
    %1817 = vsyncpa [#allocation7], 1
    %s1818 = scalar_lea.sflag [#allocation7], 1
    %1819 = vsyncpa %s1818, 1
    %1820 = vsyncpa [#allocation10], 1
    %1821 = vsyncpa [#allocation5], 1
    %s1822 = scalar_lea.sflag [#allocation5], 1
    %1823 = vsyncpa %s1822, 1

</llo_original>
